<compile_context>
chip_gen: v6e
topology: v6e:2x2x1
jax: 0.10.0
libtpu: 0.0.40
codegen_flags: <defaults>
</compile_context>

<pallas_src>
import functools
import math

import jax
import jax.numpy as jnp
import numpy as np
from jax import lax
from jax.experimental import pallas as pl
from jax.experimental.pallas import tpu as pltpu

EPS = 1e-5          # nn.LayerNorm default eps
NEG = -1e30         # finite "-inf" sentinel


def _layernorm(x, w, b):
    mean = jnp.mean(x, axis=-1, keepdims=True)
    var = jnp.mean((x - mean) ** 2, axis=-1, keepdims=True)
    return (x - mean) * lax.rsqrt(var + EPS) * w + b


def block_kernel(x_ref, ln1w_ref, ln1b_ref, wqkv_ref, bqkv_ref, wo_ref, bo_ref,
                 ln2w_ref, ln2b_ref, w12_ref, wf_ref, o_ref,
                 k_cache, v_cache, *, num_heads):
    """Fused transformer block for one (batch, q-tile) grid cell.

    Invariant: the q-tile grid axis is 'arbitrary' (sequential, ascending) per
    batch element; tile qi writes its K/V into the persistent head-major VMEM
    caches and all tiles 0..qi-1 must already be cached.  Never mark that axis
    parallel or reorder the grid.
    """
    qi = pl.program_id(1)
    tq = x_ref.shape[1]
    D = x_ref.shape[2]
    hd = D // num_heads
    hidden = w12_ref.shape[1] // 2

    x = x_ref[0].astype(jnp.float32)                       # (tq, D) q-tile rows
    xln = _layernorm(x, ln1w_ref[...], ln1b_ref[...])

    # ---- QKV projection: one K=D, N=3D bf16 matmul with f32 accumulation.
    # 1/sqrt(hd) is already folded into the Q columns / bq on the host.
    qkv = jnp.dot(xln.astype(jnp.bfloat16), wqkv_ref[...],
                  preferred_element_type=jnp.float32) + bqkv_ref[...]

    def to_heads(m2d):  # (tq, D) -> (H, tq, hd); done once per grid step.
        return jnp.stack(
            [m2d[:, h * hd:(h + 1) * hd] for h in range(num_heads)], axis=0)

    q_h = to_heads(qkv[:, :D].astype(jnp.bfloat16))        # (H, tq, hd)
    k_h = to_heads(qkv[:, D:2 * D].astype(jnp.bfloat16))
    v_h = to_heads(qkv[:, 2 * D:].astype(jnp.bfloat16))
    k_cache[qi] = k_h                                      # head-major bf16 cache
    v_cache[qi] = v_h
    # TODO(synk): for very long sequences on v7x (64 MiB VMEM) page the KV cache
    # through HBM with a 2-deep manual make_async_copy pipeline instead of
    # keeping all n_q tiles resident.

    # ---- diagonal KV tile (kv == qi): the only tile needing the causal mask.
    tri = (lax.broadcasted_iota(jnp.int32, (tq, tq), 1)
           <= lax.broadcasted_iota(jnp.int32, (tq, tq), 0))
    s = jnp.einsum('hqd,hkd->hqk', q_h, k_h,
                   preferred_element_type=jnp.float32)      # (H, tq, tq)
    s = jnp.where(tri[None], s, NEG)
    m = jnp.max(s, axis=-1, keepdims=True)                  # (H, tq, 1)
    p = jnp.exp(s - m)
    l = jnp.sum(p, axis=-1, keepdims=True)
    acc = jnp.einsum('hqk,hkd->hqd', p.astype(jnp.bfloat16), v_h,
                     preferred_element_type=jnp.float32)     # (H, tq, hd)

    # ---- off-diagonal KV tiles 0..qi-1: fully visible, zero mask work.
    def kv_step(kv, carry):
        m, l, acc = carry
        k_t = k_cache[kv]                                    # (H, tq, hd) bf16
        v_t = v_cache[kv]
        s = jnp.einsum('hqd,hkd->hqk', q_h, k_t,
                       preferred_element_type=jnp.float32)
        m_new = jnp.maximum(m, jnp.max(s, axis=-1, keepdims=True))
        alpha = jnp.exp(m - m_new)
        # TODO(synk): on v6e/v7x evaluate the bf16 EUP exp path (cast s - m_new
        # to bf16 before exp) if exp becomes the binding unit.
        p = jnp.exp(s - m_new)
        l = alpha * l + jnp.sum(p, axis=-1, keepdims=True)
        acc = alpha * acc + jnp.einsum('hqk,hkd->hqd', p.astype(jnp.bfloat16),
                                       v_t, preferred_element_type=jnp.float32)
        return m_new, l, acc

    m, l, acc = lax.fori_loop(0, qi, kv_step, (m, l, acc))   # causal tile skip

    # Deferred softmax normalization (EUP reciprocal on (H, tq, hd)), then put
    # heads back into lanes and hit wo with a single K=D matmul.
    attn = acc * pl.reciprocal(l, approx=True)
    attn = jnp.concatenate([attn[h] for h in range(num_heads)], axis=-1)  # (tq,D)
    attn = jnp.dot(attn.astype(jnp.bfloat16), wo_ref[...],
                   preferred_element_type=jnp.float32) + bo_ref[...]
    x1 = x + attn                                            # residual 1 (f32)

    # ---- fused SiLU-gated FFN.
    # TODO(synk): on v7x tile this over the hidden dim (chunk w12 columns / wf
    # rows, accumulate y) to cap the live (tq, 2*hidden) f32 intermediate.
    x1_ln = _layernorm(x1, ln2w_ref[...], ln2b_ref[...]).astype(jnp.bfloat16)
    h12 = jnp.dot(x1_ln, w12_ref[...], preferred_element_type=jnp.float32)
    h1 = h12[:, :hidden]
    h2 = h12[:, hidden:]
    g = (h1 * lax.logistic(h1) * h2).astype(jnp.bfloat16)    # SiLU(h1) * h2
    y = jnp.dot(g, wf_ref[...], preferred_element_type=jnp.float32)
    o_ref[0] = (x1 + y).astype(o_ref.dtype)                  # residual 2


def transformer_block(x, params, num_heads, *, tq=None):
    B, S, D = x.shape
    if tq is None:
        tq = min(S, 256)      # sweep up to 512 on v6e; 256 fits v7x/v5e well
    assert S % tq == 0 and tq % 8 == 0, "q tile must divide S and be 8-aligned"
    n_q = S // tq
    hd = D // num_heads
    hidden = params["w1_t"].shape[1]
    scale = 1.0 / math.sqrt(hd)

    bf16 = lambda a: a.astype(jnp.bfloat16)
    # Fold 1/sqrt(hd) into the Q projection; fuse QKV and the two FFN inputs.
    wqkv = bf16(jnp.concatenate(
        [params["wq_t"] * scale, params["wk_t"], params["wv_t"]], axis=1))
    bqkv = jnp.concatenate(
        [params["bq"] * scale, params["bk"], params["bv"]], axis=1)
    w12 = bf16(jnp.concatenate([params["w1_t"], params["w2_t"]], axis=1))
    wo = bf16(params["wo_t"])
    wf = bf16(params["wf_t"])

    # Grid-invariant operands: memory-space-only VMEM spec => single resident
    # copy for the whole kernel, no per-step DMA and no double-buffering.
    wspec = pl.BlockSpec(memory_space=pltpu.MemorySpace.VMEM)
    xspec = pl.BlockSpec((1, tq, D), lambda b, q: (b, q, 0))

    # Size the VMEM budget per generation, leaving headroom for compiler scratch.
    try:
        vmem_cap = pltpu.get_tpu_info().vmem_capacity_bytes
    except Exception:
        vmem_cap = 64 << 20
    vmem_limit = int(max(32 << 20, min(vmem_cap - (16 << 20), 112 << 20)))

    kernel = functools.partial(block_kernel, num_heads=num_heads)
    # TODO(synk): for v7x (2 TensorCores) and small B, add a head-group grid
    # axis marked "parallel" with column-split wqkv/wo and per-group KV caches.
    return pl.pallas_call(
        kernel,
        out_shape=jax.ShapeDtypeStruct((B, S, D), x.dtype),
        grid=(B, n_q),
        in_specs=[xspec] + [wspec] * 10,
        out_specs=xspec,
        # Persistent head-major bf16 K/V caches.  Correctness requires the
        # q-tile axis to run sequentially in ascending order (see kernel doc).
        scratch_shapes=[pltpu.VMEM((n_q, num_heads, tq, hd), jnp.bfloat16),
                        pltpu.VMEM((n_q, num_heads, tq, hd), jnp.bfloat16)],
        compiler_params=pltpu.CompilerParams(
            dimension_semantics=("parallel", "arbitrary"),
            vmem_limit_bytes=vmem_limit),
    )(x, params["ln1_w"], params["ln1_b"], wqkv, bqkv, wo, params["bo"],
      params["ln2_w"], params["ln2_b"], w12, wf)


def reference(x, params, num_heads):
    """Pure-JAX f32 reference mirroring the PyTorch forward, for validation."""
    def ln(t, w, b):
        mean = t.mean(-1, keepdims=True)
        var = ((t - mean) ** 2).mean(-1, keepdims=True)
        return (t - mean) / jnp.sqrt(var + EPS) * w + b

    B, S, D = x.shape
    hd = D // num_heads
    xln = ln(x, params["ln1_w"][0], params["ln1_b"][0])
    q = xln @ params["wq_t"] + params["bq"][0]
    k = xln @ params["wk_t"] + params["bk"][0]
    v = xln @ params["wv_t"] + params["bv"][0]
    q = q.reshape(B, S, num_heads, hd).transpose(0, 2, 1, 3)
    k = k.reshape(B, S, num_heads, hd).transpose(0, 2, 1, 3)
    v = v.reshape(B, S, num_heads, hd).transpose(0, 2, 1, 3)
    s = jnp.einsum("bhqd,bhkd->bhqk", q, k) / math.sqrt(hd)
    mask = jnp.triu(jnp.full((S, S), -jnp.inf), k=1)
    s = s + mask
    p = jax.nn.softmax(s, axis=-1)
    o = jnp.einsum("bhqk,bhkd->bhqd", p, v).transpose(0, 2, 1, 3).reshape(B, S, D)
    o = o @ params["wo_t"] + params["bo"][0]
    x = x + o
    xln = ln(x, params["ln2_w"][0], params["ln2_b"][0])
    h1 = xln @ params["w1_t"]
    h2 = xln @ params["w2_t"]
    return x + (h1 * jax.nn.sigmoid(h1) * h2) @ params["wf_t"]


def init_params(key, D, widening_factor=4):
    hidden = D * widening_factor
    ks = jax.random.split(key, 12)
    n = lambda k, shp, s=0.05: (s * jax.random.normal(k, shp)).astype(jnp.float32)
    return {
        "ln1_w": jnp.ones((1, D), jnp.float32) + n(ks[0], (1, D), 0.01),
        "ln1_b": n(ks[1], (1, D), 0.01),
        "wq_t": n(ks[2], (D, D)),
        "wk_t": n(ks[3], (D, D)),
        "wv_t": n(ks[4], (D, D)),
        "bq": n(ks[5], (1, D), 0.01),
        "bk": n(ks[6], (1, D), 0.01),
        "bv": n(ks[7], (1, D), 0.01),
        "wo_t": n(ks[8], (D, D)),
        "bo": n(ks[9], (1, D), 0.01),
        "ln2_w": jnp.ones((1, D), jnp.float32) + n(ks[10], (1, D), 0.01),
        "ln2_b": n(ks[11], (1, D), 0.01),
        "w1_t": n(jax.random.fold_in(key, 100), (D, hidden)),
        "w2_t": n(jax.random.fold_in(key, 101), (D, hidden)),
        "wf_t": n(jax.random.fold_in(key, 102), (hidden, D)),
    }


if __name__ == "__main__":
    # Small shapes; S=16 with tq=8 exercises the multi-tile causal flash loop,
    # the diagonal-tile mask path, and the persistent KV cache (n_q = 2).
    B, S, D, H = 2, 16, 32, 4
    key = jax.random.PRNGKey(0)
    kx, kp = jax.random.split(key)
    x = jax.random.normal(kx, (B, S, D), jnp.float32)
    params = init_params(kp, D)

    out = transformer_block(x, params, H, tq=8)
    out = jax.block_until_ready(out)

    ref = jax.block_until_ready(reference(x, params, H))
    assert out.shape == (B, S, D)
    # Tolerance reflects bf16 MXU operands + approx reciprocal vs f32 reference.
    assert np.allclose(np.asarray(out), np.asarray(ref), atol=2e-2, rtol=2e-2), (
        float(np.max(np.abs(np.asarray(out) - np.asarray(ref)))))

    print("KERNEL_OK")
</pallas_src>

<mosaic_0001>
module attributes {stable_mosaic.version = 11 : i64} {
  func.func @block_kernel(%arg0: i32, %arg1: i32, %arg2: memref<1x8x32xf32, #tpu.memory_space<vmem>>, %arg3: memref<1x32xf32, #tpu.memory_space<vmem>>, %arg4: memref<1x32xf32, #tpu.memory_space<vmem>>, %arg5: memref<32x96xbf16, #tpu.memory_space<vmem>>, %arg6: memref<1x96xf32, #tpu.memory_space<vmem>>, %arg7: memref<32x32xbf16, #tpu.memory_space<vmem>>, %arg8: memref<1x32xf32, #tpu.memory_space<vmem>>, %arg9: memref<1x32xf32, #tpu.memory_space<vmem>>, %arg10: memref<1x32xf32, #tpu.memory_space<vmem>>, %arg11: memref<32x256xbf16, #tpu.memory_space<vmem>>, %arg12: memref<128x32xbf16, #tpu.memory_space<vmem>>, %arg13: memref<1x8x32xf32, #tpu.memory_space<vmem>>, %arg14: memref<2x4x8x8xbf16, #tpu.memory_space<vmem>>, %arg15: memref<2x4x8x8xbf16, #tpu.memory_space<vmem>>) attributes {dimension_semantics = [#tpu.dimension_semantics<parallel>, #tpu.dimension_semantics<arbitrary>], iteration_bounds = array<i64: 2, 2>, scalar_prefetch = 0 : i64, scratch_operands = 2 : i64, tpu.core_type = #tpu.core_type<tc>, window_params = [{transform_indices = @transform_0, window_bounds = array<i64: 1, 8, 32>}, {pipeline_mode = #tpu.pipeline_mode<synchronous>, transform_indices = @transform_1, window_bounds = array<i64: 1, 32>}, {pipeline_mode = #tpu.pipeline_mode<synchronous>, transform_indices = @transform_2, window_bounds = array<i64: 1, 32>}, {pipeline_mode = #tpu.pipeline_mode<synchronous>, transform_indices = @transform_3, window_bounds = array<i64: 32, 96>}, {pipeline_mode = #tpu.pipeline_mode<synchronous>, transform_indices = @transform_4, window_bounds = array<i64: 1, 96>}, {pipeline_mode = #tpu.pipeline_mode<synchronous>, transform_indices = @transform_5, window_bounds = array<i64: 32, 32>}, {pipeline_mode = #tpu.pipeline_mode<synchronous>, transform_indices = @transform_6, window_bounds = array<i64: 1, 32>}, {pipeline_mode = #tpu.pipeline_mode<synchronous>, transform_indices = @transform_7, window_bounds = array<i64: 1, 32>}, {pipeline_mode = #tpu.pipeline_mode<synchronous>, transform_indices = @transform_8, window_bounds = array<i64: 1, 32>}, {pipeline_mode = #tpu.pipeline_mode<synchronous>, transform_indices = @transform_9, window_bounds = array<i64: 32, 256>}, {pipeline_mode = #tpu.pipeline_mode<synchronous>, transform_indices = @transform_10, window_bounds = array<i64: 128, 32>}, {transform_indices = @transform_11, window_bounds = array<i64: 1, 8, 32>}]} {
    %c0 = arith.constant 0 : index
    %c0_0 = arith.constant 0 : index
    %c0_1 = arith.constant 0 : index
    %0 = vector.load %arg2[%c0, %c0_0, %c0_1] : memref<1x8x32xf32, #tpu.memory_space<vmem>>, vector<1x8x32xf32>
    %1 = vector.shape_cast %0 : vector<1x8x32xf32> to vector<8x32xf32>
    %c0_2 = arith.constant 0 : index
    %c0_3 = arith.constant 0 : index
    %2 = vector.load %arg3[%c0_2, %c0_3] : memref<1x32xf32, #tpu.memory_space<vmem>>, vector<1x32xf32>
    %c0_4 = arith.constant 0 : index
    %c0_5 = arith.constant 0 : index
    %3 = vector.load %arg4[%c0_4, %c0_5] : memref<1x32xf32, #tpu.memory_space<vmem>>, vector<1x32xf32>
    %cst = arith.constant dense<0.000000e+00> : vector<8xf32>
    %4 = vector.multi_reduction <add>, %1, %cst [1] : vector<8x32xf32> to vector<8xf32>
    %5 = vector.shape_cast %4 : vector<8xf32> to vector<8x1xf32>
    %cst_6 = arith.constant 3.200000e+01 : f32
    %6 = vector.broadcast %cst_6 : f32 to vector<8x1xf32>
    %7 = arith.divf %5, %6 : vector<8x1xf32>
    %8 = vector.broadcast %7 : vector<8x1xf32> to vector<8x32xf32>
    %9 = arith.subf %1, %8 : vector<8x32xf32>
    %10 = arith.mulf %9, %9 : vector<8x32xf32>
    %cst_7 = arith.constant dense<0.000000e+00> : vector<8xf32>
    %11 = vector.multi_reduction <add>, %10, %cst_7 [1] : vector<8x32xf32> to vector<8xf32>
    %12 = vector.shape_cast %11 : vector<8xf32> to vector<8x1xf32>
    %cst_8 = arith.constant 3.200000e+01 : f32
    %13 = vector.broadcast %cst_8 : f32 to vector<8x1xf32>
    %14 = arith.divf %12, %13 : vector<8x1xf32>
    %15 = vector.broadcast %7 : vector<8x1xf32> to vector<8x32xf32>
    %16 = arith.subf %1, %15 : vector<8x32xf32>
    %cst_9 = arith.constant 9.99999974E-6 : f32
    %17 = vector.broadcast %cst_9 : f32 to vector<8x1xf32>
    %18 = arith.addf %14, %17 : vector<8x1xf32>
    %19 = math.rsqrt %18 : vector<8x1xf32>
    %20 = vector.broadcast %19 : vector<8x1xf32> to vector<8x32xf32>
    %21 = arith.mulf %16, %20 : vector<8x32xf32>
    %22 = vector.broadcast %2 : vector<1x32xf32> to vector<8x32xf32>
    %23 = arith.mulf %21, %22 : vector<8x32xf32>
    %24 = vector.broadcast %3 : vector<1x32xf32> to vector<8x32xf32>
    %25 = arith.addf %23, %24 : vector<8x32xf32>
    %26 = arith.truncf %25 : vector<8x32xf32> to vector<8x32xbf16>
    %c0_10 = arith.constant 0 : index
    %c0_11 = arith.constant 0 : index
    %27 = vector.load %arg5[%c0_10, %c0_11] : memref<32x96xbf16, #tpu.memory_space<vmem>>, vector<32x96xbf16>
    %cst_12 = arith.constant dense<0.000000e+00> : vector<8x96xf32>
    %28 = tpu.matmul %26, %27, %cst_12 {dimension_numbers = #tpu.dot_dimension_numbers<[1], [0], [0], [1], [0, 0, 1, 1], [], []>} : vector<8x32xbf16>, vector<32x96xbf16>, vector<8x96xf32> -> vector<8x96xf32>
    %c0_13 = arith.constant 0 : index
    %c0_14 = arith.constant 0 : index
    %29 = vector.load %arg6[%c0_13, %c0_14] : memref<1x96xf32, #tpu.memory_space<vmem>>, vector<1x96xf32>
    %30 = vector.broadcast %29 : vector<1x96xf32> to vector<8x96xf32>
    %31 = arith.addf %28, %30 : vector<8x96xf32>
    %32 = vector.extract_strided_slice %31 {offsets = [0, 0], sizes = [8, 32], strides = [1, 1]} : vector<8x96xf32> to vector<8x32xf32>
    %33 = arith.truncf %32 : vector<8x32xf32> to vector<8x32xbf16>
    %34 = vector.extract_strided_slice %33 {offsets = [0, 0], sizes = [8, 8], strides = [1, 1]} : vector<8x32xbf16> to vector<8x8xbf16>
    %35 = vector.extract_strided_slice %33 {offsets = [0, 8], sizes = [8, 8], strides = [1, 1]} : vector<8x32xbf16> to vector<8x8xbf16>
    %36 = vector.extract_strided_slice %33 {offsets = [0, 16], sizes = [8, 8], strides = [1, 1]} : vector<8x32xbf16> to vector<8x8xbf16>
    %37 = vector.extract_strided_slice %33 {offsets = [0, 24], sizes = [8, 8], strides = [1, 1]} : vector<8x32xbf16> to vector<8x8xbf16>
    %38 = vector.shape_cast %34 : vector<8x8xbf16> to vector<1x8x8xbf16>
    %39 = vector.shape_cast %35 : vector<8x8xbf16> to vector<1x8x8xbf16>
    %40 = vector.shape_cast %36 : vector<8x8xbf16> to vector<1x8x8xbf16>
    %41 = vector.shape_cast %37 : vector<8x8xbf16> to vector<1x8x8xbf16>
    %42 = tpu.concatenate %38, %39, %40, %41 in 0 : vector<1x8x8xbf16>, vector<1x8x8xbf16>, vector<1x8x8xbf16>, vector<1x8x8xbf16> -> vector<4x8x8xbf16>
    %43 = vector.extract_strided_slice %31 {offsets = [0, 32], sizes = [8, 32], strides = [1, 1]} : vector<8x96xf32> to vector<8x32xf32>
    %44 = arith.truncf %43 : vector<8x32xf32> to vector<8x32xbf16>
    %45 = vector.extract_strided_slice %44 {offsets = [0, 0], sizes = [8, 8], strides = [1, 1]} : vector<8x32xbf16> to vector<8x8xbf16>
    %46 = vector.extract_strided_slice %44 {offsets = [0, 8], sizes = [8, 8], strides = [1, 1]} : vector<8x32xbf16> to vector<8x8xbf16>
    %47 = vector.extract_strided_slice %44 {offsets = [0, 16], sizes = [8, 8], strides = [1, 1]} : vector<8x32xbf16> to vector<8x8xbf16>
    %48 = vector.extract_strided_slice %44 {offsets = [0, 24], sizes = [8, 8], strides = [1, 1]} : vector<8x32xbf16> to vector<8x8xbf16>
    %49 = vector.shape_cast %45 : vector<8x8xbf16> to vector<1x8x8xbf16>
    %50 = vector.shape_cast %46 : vector<8x8xbf16> to vector<1x8x8xbf16>
    %51 = vector.shape_cast %47 : vector<8x8xbf16> to vector<1x8x8xbf16>
    %52 = vector.shape_cast %48 : vector<8x8xbf16> to vector<1x8x8xbf16>
    %53 = tpu.concatenate %49, %50, %51, %52 in 0 : vector<1x8x8xbf16>, vector<1x8x8xbf16>, vector<1x8x8xbf16>, vector<1x8x8xbf16> -> vector<4x8x8xbf16>
    %54 = vector.extract_strided_slice %31 {offsets = [0, 64], sizes = [8, 32], strides = [1, 1]} : vector<8x96xf32> to vector<8x32xf32>
    %55 = arith.truncf %54 : vector<8x32xf32> to vector<8x32xbf16>
    %56 = vector.extract_strided_slice %55 {offsets = [0, 0], sizes = [8, 8], strides = [1, 1]} : vector<8x32xbf16> to vector<8x8xbf16>
    %57 = vector.extract_strided_slice %55 {offsets = [0, 8], sizes = [8, 8], strides = [1, 1]} : vector<8x32xbf16> to vector<8x8xbf16>
    %58 = vector.extract_strided_slice %55 {offsets = [0, 16], sizes = [8, 8], strides = [1, 1]} : vector<8x32xbf16> to vector<8x8xbf16>
    %59 = vector.extract_strided_slice %55 {offsets = [0, 24], sizes = [8, 8], strides = [1, 1]} : vector<8x32xbf16> to vector<8x8xbf16>
    %60 = vector.shape_cast %56 : vector<8x8xbf16> to vector<1x8x8xbf16>
    %61 = vector.shape_cast %57 : vector<8x8xbf16> to vector<1x8x8xbf16>
    %62 = vector.shape_cast %58 : vector<8x8xbf16> to vector<1x8x8xbf16>
    %63 = vector.shape_cast %59 : vector<8x8xbf16> to vector<1x8x8xbf16>
    %64 = tpu.concatenate %60, %61, %62, %63 in 0 : vector<1x8x8xbf16>, vector<1x8x8xbf16>, vector<1x8x8xbf16>, vector<1x8x8xbf16> -> vector<4x8x8xbf16>
    %65 = arith.index_cast %arg1 : i32 to index
    %c0_15 = arith.constant 0 : index
    %c0_16 = arith.constant 0 : index
    %c0_17 = arith.constant 0 : index
    %66 = vector.load %arg14[%65, %c0_15, %c0_16, %c0_17] : memref<2x4x8x8xbf16, #tpu.memory_space<vmem>>, vector<1x4x8x8xbf16>
    %67 = vector.shape_cast %66 : vector<1x4x8x8xbf16> to vector<4x8x8xbf16>
    %68 = vector.shape_cast %53 : vector<4x8x8xbf16> to vector<1x4x8x8xbf16>
    tpu.vector_store %arg14[%65, %c0_15, %c0_16, %c0_17], %68 {strides = array<i32>} : memref<2x4x8x8xbf16, #tpu.memory_space<vmem>>, vector<1x4x8x8xbf16>,
    %69 = arith.index_cast %arg1 : i32 to index
    %c0_18 = arith.constant 0 : index
    %c0_19 = arith.constant 0 : index
    %c0_20 = arith.constant 0 : index
    %70 = vector.load %arg15[%69, %c0_18, %c0_19, %c0_20] : memref<2x4x8x8xbf16, #tpu.memory_space<vmem>>, vector<1x4x8x8xbf16>
    %71 = vector.shape_cast %70 : vector<1x4x8x8xbf16> to vector<4x8x8xbf16>
    %72 = vector.shape_cast %64 : vector<4x8x8xbf16> to vector<1x4x8x8xbf16>
    tpu.vector_store %arg15[%69, %c0_18, %c0_19, %c0_20], %72 {strides = array<i32>} : memref<2x4x8x8xbf16, #tpu.memory_space<vmem>>, vector<1x4x8x8xbf16>,
    %73 = tpu.iota {dimensions = array<i32: 1>} : vector<8x8xi32>
    %74 = tpu.iota {dimensions = array<i32: 0>} : vector<8x8xi32>
    %75 = arith.cmpi sle, %73, %74 : vector<8x8xi32>
    "tpu.trace_start"() <{level = 10 : i32, message = "hqd,hkd->hqk"}> : () -> ()
    %cst_21 = arith.constant dense<0.000000e+00> : vector<4x8x8xf32>
    %76 = tpu.matmul %42, %53, %cst_21 {dimension_numbers = #tpu.dot_dimension_numbers<[2], [2], [1], [1], [0, 0, 0, 1, 1, 1], [0], [0]>} : vector<4x8x8xbf16>, vector<4x8x8xbf16>, vector<4x8x8xf32> -> vector<4x8x8xf32>
    "tpu.trace_stop"() : () -> ()
    %77 = vector.shape_cast %75 : vector<8x8xi1> to vector<1x8x8xi1>
    %cst_22 = arith.constant -1.000000e+30 : f32
    %78 = vector.shape_cast %77 : vector<1x8x8xi1> to vector<1x8x8xi1>
    %79 = vector.broadcast %78 : vector<1x8x8xi1> to vector<4x8x8xi1>
    %80 = vector.broadcast %cst_22 : f32 to vector<4x8x8xf32>
    %81 = arith.select %79, %76, %80 : vector<4x8x8xi1>, vector<4x8x8xf32>
    %cst_23 = arith.constant dense<0xFF800000> : vector<4x8xf32>
    %82 = vector.multi_reduction <maximumf>, %81, %cst_23 [2] : vector<4x8x8xf32> to vector<4x8xf32>
    %83 = vector.shape_cast %82 : vector<4x8xf32> to vector<4x8x1xf32>
    %84 = vector.broadcast %83 : vector<4x8x1xf32> to vector<4x8x8xf32>
    %85 = arith.subf %81, %84 : vector<4x8x8xf32>
    %86 = math.exp %85 : vector<4x8x8xf32>
    %cst_24 = arith.constant dense<0.000000e+00> : vector<4x8xf32>
    %87 = vector.multi_reduction <add>, %86, %cst_24 [2] : vector<4x8x8xf32> to vector<4x8xf32>
    %88 = vector.shape_cast %87 : vector<4x8xf32> to vector<4x8x1xf32>
    %89 = arith.truncf %86 : vector<4x8x8xf32> to vector<4x8x8xbf16>
    "tpu.trace_start"() <{level = 10 : i32, message = "hqk,hkd->hqd"}> : () -> ()
    %cst_25 = arith.constant dense<0.000000e+00> : vector<4x8x8xf32>
    %90 = tpu.matmul %89, %64, %cst_25 {dimension_numbers = #tpu.dot_dimension_numbers<[2], [1], [1], [2], [0, 0, 0, 1, 1, 2], [0], [0]>} : vector<4x8x8xbf16>, vector<4x8x8xbf16>, vector<4x8x8xf32> -> vector<4x8x8xf32>
    %c0_i32 = arith.constant 0 : i32
    "tpu.trace_stop"() : () -> ()
    %91 = arith.subi %arg1, %c0_i32 : i32
    %92 = arith.addi %c0_i32, %91 : i32
    %c1_i32 = arith.constant 1 : i32
    %93:3 = scf.for %arg16 = %c0_i32 to %92 step %c1_i32 iter_args(%arg17 = %83, %arg18 = %88, %arg19 = %90) -> (vector<4x8x1xf32>, vector<4x8x1xf32>, vector<4x8x8xf32>)  : i32 {
      %156 = arith.index_cast %arg16 : i32 to index
      %c0_50 = arith.constant 0 : index
      %c0_51 = arith.constant 0 : index
      %c0_52 = arith.constant 0 : index
      %157 = vector.load %arg14[%156, %c0_50, %c0_51, %c0_52] : memref<2x4x8x8xbf16, #tpu.memory_space<vmem>>, vector<1x4x8x8xbf16>
      %158 = vector.shape_cast %157 : vector<1x4x8x8xbf16> to vector<4x8x8xbf16>
      %159 = arith.index_cast %arg16 : i32 to index
      %c0_53 = arith.constant 0 : index
      %c0_54 = arith.constant 0 : index
      %c0_55 = arith.constant 0 : index
      %160 = vector.load %arg15[%159, %c0_53, %c0_54, %c0_55] : memref<2x4x8x8xbf16, #tpu.memory_space<vmem>>, vector<1x4x8x8xbf16>
      %161 = vector.shape_cast %160 : vector<1x4x8x8xbf16> to vector<4x8x8xbf16>
      "tpu.trace_start"() <{level = 10 : i32, message = "hqd,hkd->hqk"}> : () -> ()
      %cst_56 = arith.constant dense<0.000000e+00> : vector<4x8x8xf32>
      %162 = tpu.matmul %42, %158, %cst_56 {dimension_numbers = #tpu.dot_dimension_numbers<[2], [2], [1], [1], [0, 0, 0, 1, 1, 1], [0], [0]>} : vector<4x8x8xbf16>, vector<4x8x8xbf16>, vector<4x8x8xf32> -> vector<4x8x8xf32>
      "tpu.trace_stop"() : () -> ()
      %cst_57 = arith.constant dense<0xFF800000> : vector<4x8xf32>
      %163 = vector.multi_reduction <maximumf>, %162, %cst_57 [2] : vector<4x8x8xf32> to vector<4x8xf32>
      %164 = vector.shape_cast %163 : vector<4x8xf32> to vector<4x8x1xf32>
      %165 = arith.maximumf %arg17, %164 : vector<4x8x1xf32>
      %166 = arith.subf %arg17, %165 : vector<4x8x1xf32>
      %167 = math.exp %166 : vector<4x8x1xf32>
      %168 = vector.broadcast %165 : vector<4x8x1xf32> to vector<4x8x8xf32>
      %169 = arith.subf %162, %168 : vector<4x8x8xf32>
      %170 = math.exp %169 : vector<4x8x8xf32>
      %171 = arith.mulf %167, %arg18 : vector<4x8x1xf32>
      %cst_58 = arith.constant dense<0.000000e+00> : vector<4x8xf32>
      %172 = vector.multi_reduction <add>, %170, %cst_58 [2] : vector<4x8x8xf32> to vector<4x8xf32>
      %173 = vector.shape_cast %172 : vector<4x8xf32> to vector<4x8x1xf32>
      %174 = arith.addf %171, %173 : vector<4x8x1xf32>
      %175 = vector.broadcast %167 : vector<4x8x1xf32> to vector<4x8x8xf32>
      %176 = arith.mulf %175, %arg19 : vector<4x8x8xf32>
      %177 = arith.truncf %170 : vector<4x8x8xf32> to vector<4x8x8xbf16>
      "tpu.trace_start"() <{level = 10 : i32, message = "hqk,hkd->hqd"}> : () -> ()
      %cst_59 = arith.constant dense<0.000000e+00> : vector<4x8x8xf32>
      %178 = tpu.matmul %177, %161, %cst_59 {dimension_numbers = #tpu.dot_dimension_numbers<[2], [1], [1], [2], [0, 0, 0, 1, 1, 2], [0], [0]>} : vector<4x8x8xbf16>, vector<4x8x8xbf16>, vector<4x8x8xf32> -> vector<4x8x8xf32>
      "tpu.trace_stop"() : () -> ()
      %179 = arith.addf %176, %178 : vector<4x8x8xf32>
      scf.yield %165, %174, %179 : vector<4x8x1xf32>, vector<4x8x1xf32>, vector<4x8x8xf32>
    }
    %94 = tpu.reciprocal %93#1 {approx = true} : vector<4x8x1xf32> -> vector<4x8x1xf32>
    %95 = vector.broadcast %94 : vector<4x8x1xf32> to vector<4x8x8xf32>
    %96 = arith.mulf %93#2, %95 : vector<4x8x8xf32>
    %97 = vector.extract_strided_slice %96 {offsets = [0, 0, 0], sizes = [1, 8, 8], strides = [1, 1, 1]} : vector<4x8x8xf32> to vector<1x8x8xf32>
    %98 = vector.shape_cast %97 : vector<1x8x8xf32> to vector<8x8xf32>
    %99 = vector.extract_strided_slice %96 {offsets = [1, 0, 0], sizes = [1, 8, 8], strides = [1, 1, 1]} : vector<4x8x8xf32> to vector<1x8x8xf32>
    %100 = vector.shape_cast %99 : vector<1x8x8xf32> to vector<8x8xf32>
    %101 = vector.extract_strided_slice %96 {offsets = [2, 0, 0], sizes = [1, 8, 8], strides = [1, 1, 1]} : vector<4x8x8xf32> to vector<1x8x8xf32>
    %102 = vector.shape_cast %101 : vector<1x8x8xf32> to vector<8x8xf32>
    %103 = vector.extract_strided_slice %96 {offsets = [3, 0, 0], sizes = [1, 8, 8], strides = [1, 1, 1]} : vector<4x8x8xf32> to vector<1x8x8xf32>
    %104 = vector.shape_cast %103 : vector<1x8x8xf32> to vector<8x8xf32>
    %105 = tpu.concatenate %98, %100, %102, %104 in 1 : vector<8x8xf32>, vector<8x8xf32>, vector<8x8xf32>, vector<8x8xf32> -> vector<8x32xf32>
    %106 = arith.truncf %105 : vector<8x32xf32> to vector<8x32xbf16>
    %c0_26 = arith.constant 0 : index
    %c0_27 = arith.constant 0 : index
    %107 = vector.load %arg7[%c0_26, %c0_27] : memref<32x32xbf16, #tpu.memory_space<vmem>>, vector<32x32xbf16>
    %cst_28 = arith.constant dense<0.000000e+00> : vector<8x32xf32>
    %108 = tpu.matmul %106, %107, %cst_28 {dimension_numbers = #tpu.dot_dimension_numbers<[1], [0], [0], [1], [0, 0, 1, 1], [], []>} : vector<8x32xbf16>, vector<32x32xbf16>, vector<8x32xf32> -> vector<8x32xf32>
    %c0_29 = arith.constant 0 : index
    %c0_30 = arith.constant 0 : index
    %109 = vector.load %arg8[%c0_29, %c0_30] : memref<1x32xf32, #tpu.memory_space<vmem>>, vector<1x32xf32>
    %110 = vector.broadcast %109 : vector<1x32xf32> to vector<8x32xf32>
    %111 = arith.addf %108, %110 : vector<8x32xf32>
    %112 = arith.addf %1, %111 : vector<8x32xf32>
    %c0_31 = arith.constant 0 : index
    %c0_32 = arith.constant 0 : index
    %113 = vector.load %arg9[%c0_31, %c0_32] : memref<1x32xf32, #tpu.memory_space<vmem>>, vector<1x32xf32>
    %c0_33 = arith.constant 0 : index
    %c0_34 = arith.constant 0 : index
    %114 = vector.load %arg10[%c0_33, %c0_34] : memref<1x32xf32, #tpu.memory_space<vmem>>, vector<1x32xf32>
    %cst_35 = arith.constant dense<0.000000e+00> : vector<8xf32>
    %115 = vector.multi_reduction <add>, %112, %cst_35 [1] : vector<8x32xf32> to vector<8xf32>
    %116 = vector.shape_cast %115 : vector<8xf32> to vector<8x1xf32>
    %cst_36 = arith.constant 3.200000e+01 : f32
    %117 = vector.broadcast %cst_36 : f32 to vector<8x1xf32>
    %118 = arith.divf %116, %117 : vector<8x1xf32>
    %119 = vector.broadcast %118 : vector<8x1xf32> to vector<8x32xf32>
    %120 = arith.subf %112, %119 : vector<8x32xf32>
    %121 = arith.mulf %120, %120 : vector<8x32xf32>
    %cst_37 = arith.constant dense<0.000000e+00> : vector<8xf32>
    %122 = vector.multi_reduction <add>, %121, %cst_37 [1] : vector<8x32xf32> to vector<8xf32>
    %123 = vector.shape_cast %122 : vector<8xf32> to vector<8x1xf32>
    %cst_38 = arith.constant 3.200000e+01 : f32
    %124 = vector.broadcast %cst_38 : f32 to vector<8x1xf32>
    %125 = arith.divf %123, %124 : vector<8x1xf32>
    %126 = vector.broadcast %118 : vector<8x1xf32> to vector<8x32xf32>
    %127 = arith.subf %112, %126 : vector<8x32xf32>
    %cst_39 = arith.constant 9.99999974E-6 : f32
    %128 = vector.broadcast %cst_39 : f32 to vector<8x1xf32>
    %129 = arith.addf %125, %128 : vector<8x1xf32>
    %130 = math.rsqrt %129 : vector<8x1xf32>
    %131 = vector.broadcast %130 : vector<8x1xf32> to vector<8x32xf32>
    %132 = arith.mulf %127, %131 : vector<8x32xf32>
    %133 = vector.broadcast %113 : vector<1x32xf32> to vector<8x32xf32>
    %134 = arith.mulf %132, %133 : vector<8x32xf32>
    %135 = vector.broadcast %114 : vector<1x32xf32> to vector<8x32xf32>
    %136 = arith.addf %134, %135 : vector<8x32xf32>
    %137 = arith.truncf %136 : vector<8x32xf32> to vector<8x32xbf16>
    %c0_40 = arith.constant 0 : index
    %c0_41 = arith.constant 0 : index
    %138 = vector.load %arg11[%c0_40, %c0_41] : memref<32x256xbf16, #tpu.memory_space<vmem>>, vector<32x256xbf16>
    %cst_42 = arith.constant dense<0.000000e+00> : vector<8x256xf32>
    %139 = tpu.matmul %137, %138, %cst_42 {dimension_numbers = #tpu.dot_dimension_numbers<[1], [0], [0], [1], [0, 0, 1, 1], [], []>} : vector<8x32xbf16>, vector<32x256xbf16>, vector<8x256xf32> -> vector<8x256xf32>
    %140 = vector.extract_strided_slice %139 {offsets = [0, 0], sizes = [8, 128], strides = [1, 1]} : vector<8x256xf32> to vector<8x128xf32>
    %141 = vector.extract_strided_slice %139 {offsets = [0, 128], sizes = [8, 128], strides = [1, 1]} : vector<8x256xf32> to vector<8x128xf32>
    %142 = arith.negf %140 : vector<8x128xf32>
    %143 = math.exp %142 : vector<8x128xf32>
    %cst_43 = arith.constant 1.000000e+00 : f32
    %144 = vector.broadcast %cst_43 : f32 to vector<8x128xf32>
    %145 = arith.addf %144, %143 : vector<8x128xf32>
    %146 = arith.divf %144, %145 : vector<8x128xf32>
    %147 = arith.mulf %140, %146 : vector<8x128xf32>
    %148 = arith.mulf %147, %141 : vector<8x128xf32>
    %149 = arith.truncf %148 : vector<8x128xf32> to vector<8x128xbf16>
    %c0_44 = arith.constant 0 : index
    %c0_45 = arith.constant 0 : index
    %150 = vector.load %arg12[%c0_44, %c0_45] : memref<128x32xbf16, #tpu.memory_space<vmem>>, vector<128x32xbf16>
    %cst_46 = arith.constant dense<0.000000e+00> : vector<8x32xf32>
    %151 = tpu.matmul %149, %150, %cst_46 {dimension_numbers = #tpu.dot_dimension_numbers<[1], [0], [0], [1], [0, 0, 1, 1], [], []>} : vector<8x128xbf16>, vector<128x32xbf16>, vector<8x32xf32> -> vector<8x32xf32>
    %152 = arith.addf %112, %151 : vector<8x32xf32>
    %c0_47 = arith.constant 0 : index
    %c0_48 = arith.constant 0 : index
    %c0_49 = arith.constant 0 : index
    %153 = vector.load %arg13[%c0_47, %c0_48, %c0_49] : memref<1x8x32xf32, #tpu.memory_space<vmem>>, vector<1x8x32xf32>
    %154 = vector.shape_cast %153 : vector<1x8x32xf32> to vector<8x32xf32>
    %155 = vector.shape_cast %152 : vector<8x32xf32> to vector<1x8x32xf32>
    tpu.vector_store %arg13[%c0_47, %c0_48, %c0_49], %155 {strides = array<i32>} : memref<1x8x32xf32, #tpu.memory_space<vmem>>, vector<1x8x32xf32>,
    return
  }
  func.func @transform_0(%arg0: i32, %arg1: i32) -> (i32, i32, i32) {
    %c0_i32 = arith.constant 0 : i32
    %c0_i32_0 = arith.constant 0 : i32
    return %arg0, %arg1, %c0_i32 : i32, i32, i32
  }
  func.func @transform_1(%arg0: i32, %arg1: i32) -> (i32, i32) {
    %c0_i32 = arith.constant 0 : i32
    %c0_i32_0 = arith.constant 0 : i32
    %c0_i32_1 = arith.constant 0 : i32
    return %c0_i32, %c0_i32_0 : i32, i32
  }
  func.func @transform_2(%arg0: i32, %arg1: i32) -> (i32, i32) {
    %c0_i32 = arith.constant 0 : i32
    %c0_i32_0 = arith.constant 0 : i32
    %c0_i32_1 = arith.constant 0 : i32
    return %c0_i32, %c0_i32_0 : i32, i32
  }
  func.func @transform_3(%arg0: i32, %arg1: i32) -> (i32, i32) {
    %c0_i32 = arith.constant 0 : i32
    %c0_i32_0 = arith.constant 0 : i32
    %c0_i32_1 = arith.constant 0 : i32
    return %c0_i32, %c0_i32_0 : i32, i32
  }
  func.func @transform_4(%arg0: i32, %arg1: i32) -> (i32, i32) {
    %c0_i32 = arith.constant 0 : i32
    %c0_i32_0 = arith.constant 0 : i32
    %c0_i32_1 = arith.constant 0 : i32
    return %c0_i32, %c0_i32_0 : i32, i32
  }
  func.func @transform_5(%arg0: i32, %arg1: i32) -> (i32, i32) {
    %c0_i32 = arith.constant 0 : i32
    %c0_i32_0 = arith.constant 0 : i32
    %c0_i32_1 = arith.constant 0 : i32
    return %c0_i32, %c0_i32_0 : i32, i32
  }
  func.func @transform_6(%arg0: i32, %arg1: i32) -> (i32, i32) {
    %c0_i32 = arith.constant 0 : i32
    %c0_i32_0 = arith.constant 0 : i32
    %c0_i32_1 = arith.constant 0 : i32
    return %c0_i32, %c0_i32_0 : i32, i32
  }
  func.func @transform_7(%arg0: i32, %arg1: i32) -> (i32, i32) {
    %c0_i32 = arith.constant 0 : i32
    %c0_i32_0 = arith.constant 0 : i32
    %c0_i32_1 = arith.constant 0 : i32
    return %c0_i32, %c0_i32_0 : i32, i32
  }
  func.func @transform_8(%arg0: i32, %arg1: i32) -> (i32, i32) {
    %c0_i32 = arith.constant 0 : i32
    %c0_i32_0 = arith.constant 0 : i32
    %c0_i32_1 = arith.constant 0 : i32
    return %c0_i32, %c0_i32_0 : i32, i32
  }
  func.func @transform_9(%arg0: i32, %arg1: i32) -> (i32, i32) {
    %c0_i32 = arith.constant 0 : i32
    %c0_i32_0 = arith.constant 0 : i32
    %c0_i32_1 = arith.constant 0 : i32
    return %c0_i32, %c0_i32_0 : i32, i32
  }
  func.func @transform_10(%arg0: i32, %arg1: i32) -> (i32, i32) {
    %c0_i32 = arith.constant 0 : i32
    %c0_i32_0 = arith.constant 0 : i32
    %c0_i32_1 = arith.constant 0 : i32
    return %c0_i32, %c0_i32_0 : i32, i32
  }
  func.func @transform_11(%arg0: i32, %arg1: i32) -> (i32, i32, i32) {
    %c0_i32 = arith.constant 0 : i32
    %c0_i32_0 = arith.constant 0 : i32
    return %arg0, %arg1, %c0_i32 : i32, i32, i32
  }
}

</mosaic_0001>

<llo_original>
// kernel: tpu_custom_call.1
$region0: #{tpu_custom_call.1}
  #allocation0 [shape = 'u32[]', space=smem, size = 0x4, offset = 0x4, fixed_abs, tag = 'smem constant byte address 0x4 - core index']
  #allocation1 [shape = 'u32[144,128]{1,0:T(1,128)}', space=vmem, size = 0x12000, scoped, tag = 'internal scratch']
  #allocation2 [shape = 'bf16[2,4,8,8]{3,2,1,0:T(8,128)(2,1)}', space=vmem, size = 0x4000, scoped, tag = 'scratch operand']
  #allocation3 [shape = 'bf16[2,4,8,8]{3,2,1,0:T(8,128)(2,1)}', space=vmem, size = 0x4000, scoped, tag = 'scratch operand']
  %s0 = inlined_call_operand.vmem [shape: f32[2,16,32], index: 0, kind: input, shape index: {}]
  %s1 = inlined_call_operand.vmem [shape: f32[1,32], index: 1, kind: input, shape index: {}]
  %s2 = inlined_call_operand.vmem [shape: f32[1,32], index: 2, kind: input, shape index: {}]
  %s3 = inlined_call_operand.vmem [shape: bf16[32,96], index: 3, kind: input, shape index: {}]
  %s4 = inlined_call_operand.hbm [shape: f32[1,96], index: 4, kind: input, shape index: {}]
  %s5 = inlined_call_operand.hbm [shape: bf16[32,32], index: 5, kind: input, shape index: {}]
  %s6 = inlined_call_operand.hbm [shape: f32[1,32], index: 6, kind: input, shape index: {}]
  %s7 = inlined_call_operand.hbm [shape: f32[1,32], index: 7, kind: input, shape index: {}]
  %s8 = inlined_call_operand.hbm [shape: f32[1,32], index: 8, kind: input, shape index: {}]
  %s9 = inlined_call_operand.vmem [shape: bf16[32,256], index: 9, kind: input, shape index: {}]
  %s10 = inlined_call_operand.vmem [shape: bf16[128,32], index: 10, kind: input, shape index: {}]
  %s11 = inlined_call_operand.hbm [shape: f32[2,16,32], index: 11, kind: output, shape index: {}]
  %s12 = sld [smem:[#allocation0]]
  $region104: #{tpu_custom_call.1} parent=0
    _
  %s14 = ssub.s32 1, %s12
  %s15 = scalar_select 0, %s14, %s12
  $region1: #{tpu_custom_call.1} parent=0
    #allocation4 [shape = 'u8[512]{0}', space=vmem, size = 0x400, scoped, tag = 'input window, operand 4, single buffered']
    #allocation5 [shape = 's32[2]{0}', space=sflag, size = 0x8, scoped, tag = 'scoped memory for tpu_custom_call.1']
    #allocation6 [shape = 's32[2]{0}', space=sflag, size = 0x8, scoped, tag = 'scoped memory for tpu_custom_call.1']
    #allocation7 [shape = 'u8[8192]{0}', space=vmem, size = 0x2000, scoped, tag = 'input window, operand 5, single buffered']
    #allocation8 [shape = 's32[1]{0}', space=sflag, size = 0x4, scoped, tag = 'scoped memory for tpu_custom_call.1']
    #allocation9 [shape = 'u8[512]{0}', space=vmem, size = 0x400, scoped, tag = 'input window, operand 6, single buffered']
    #allocation10 [shape = 'u8[512]{0}', space=vmem, size = 0x400, scoped, tag = 'input window, operand 7, single buffered']
    #allocation11 [shape = 's32[1]{0}', space=sflag, size = 0x4, scoped, tag = 'scoped memory for tpu_custom_call.1']
    #allocation12 [shape = 'u8[512]{0}', space=vmem, size = 0x400, scoped, tag = 'input window, operand 8, single buffered']
    #allocation13 [shape = 'u8[8192]{0}', space=vmem, size = 0x2000, scoped, tag = 'output window, operand 0']
    %16 = vsyncpa [#allocation5], 0
    %17 = vsyncpa [#allocation8], 0
    %18 = vsyncpa [#allocation11], 0
    %19 = vsyncpa [#allocation6], 0
    %s20 = scalar_lea.sflag [#allocation6], 1
    %21 = vsyncpa %s20, 0
    loop: start=0, step=1, limit=6
    $region2: #{tpu_custom_call.1} parent=1 // loop_pre_header
      _
    $region3: #{tpu_custom_call.1} parent=1 // loop_header
      %s23 = sphi 0, %s27
      %p24 = scmp.ge.s32.totalorder %s23, 6
      %s30 = sphi 0, %s42
      %s31 = sphi 0, %s38
      %s32 = sphi 0, %s30
      %s33 = sphi 0, %s31
      %s34 = sphi 0, %s32
      %s35 = sphi 0, %s33
      %s47 = sphi 0, %s49
      %s50 = sphi 0, %s47
      %s51 = sphi 0, %s50
      %s67 = sphi 0, %s51
      %s71 = sphi 0, %s71
      %s73 = sphi 0, %s71
      %s74 = sphi 0, %s73
      %s88 = sphi 0, %s74
      %s92 = sphi 0, %s92
      %s94 = sphi 0, %s92
      %s95 = sphi 0, %s94
      %s109 = sphi 0, %s95
      %s113 = sphi 0, %s113
      %s115 = sphi 0, %s113
      %s116 = sphi 0, %s115
      %s130 = sphi 0, %s116
      %s134 = sphi 0, %s134
      %s136 = sphi 0, %s134
      %s137 = sphi 0, %s136
      %s151 = sphi 0, %s137
      %s155 = sphi 0, %s155
      %s157 = sphi 0, %s155
      %s158 = sphi 0, %s157
      %s172 = sphi 0, %s158
      %s176 = sphi 0, %s176
      %s178 = sphi 0, %s176
      %s179 = sphi 0, %s178
      %s193 = sphi 0, %s179
      %s197 = sphi 0, %s197
      %s199 = sphi 0, %s197
      %s200 = sphi 0, %s199
      %s214 = sphi 0, %s200
      %s218 = sphi 0, %s218
      %s220 = sphi 0, %s218
      %s221 = sphi 0, %s220
      %s235 = sphi 0, %s221
      %s239 = sphi 0, %s239
      %s241 = sphi 0, %s239
      %s242 = sphi 0, %s241
      %s256 = sphi 0, %s242
      %s260 = sphi 0, %s260
      %s262 = sphi 0, %s260
      %s263 = sphi 0, %s262
      %s277 = sphi 0, %s263
      %s285 = sphi 0, %s287
      %s288 = sphi 0, %s285
      %s289 = sphi 0, %s288
      %s305 = sphi 0, %s289
    $region4: #{tpu_custom_call.1} parent=1 // loop_header_branch
      %26 = sbr.rel (%p24) target = $region8
    $region5: #{tpu_custom_call.1} parent=1 // loop_body
      %s28 = ssub.s32 %s23, 1
      %s29 = ssub.s32 %s23, 2
      %s36 = sadd.s32 1, %s31
      %p37 = scmp.ge.s32.totalorder %s36, 2
      %s38 = scalar_select %p37, 0, %s36
      %s39 = sadd.s32 1, %s30
      %s40 = scalar_select %p37, %s39, %s30
      %p41 = scmp.ge.s32.totalorder %s40, 2
      %s42 = scalar_select %p41, 0, %s40
      %s43 = ssub.s32 %s30, %s42
      %s44 = ssub.s32 %s31, %s38
      %s45 = sor.u32 %s43, %s44
      %p46 = scmp.eq.s32.totalorder %s45, 0
      %s48 = sadd.s32 %s47, 1
      %s49 = scalar_select %p46, %s47, %s48
      %p52 = pneg %p46
      %p53 = scmp.eq.s32.totalorder %s23, 3
      %p54 = por %p52, %p53
      %p55 = scmp.ne.s32.totalorder %s47, %s50
      %p56 = scmp.eq.s32.totalorder %s23, 0
      %p57 = por %p55, %p56
      %p58 = scmp.ne.s32.totalorder %s47, %s50
      %p59 = scmp.eq.s32.totalorder %s28, 3
      %p60 = por %p58, %p59
      %p61 = scmp.ne.s32.totalorder %s50, %s51
      %p62 = scmp.eq.s32.totalorder %s28, 0
      %p63 = por %p61, %p62
      %p64 = scmp.ne.s32.totalorder %s50, %s51
      %p65 = scmp.eq.s32.totalorder %s29, 3
      %p66 = por %p64, %p65
      %p68 = scmp.ne.s32.totalorder %s51, %s67
      %p69 = scmp.eq.s32.totalorder %s29, 0
      %p70 = por %p68, %p69
      %s72 = sadd.s32 %s71, 1
      %p75 = scmp.eq.s32.totalorder %s23, 3
      %p76 = scmp.ne.s32.totalorder %s71, %s73
      %p77 = scmp.eq.s32.totalorder %s23, 0
      %p78 = por %p76, %p77
      %p79 = scmp.ne.s32.totalorder %s71, %s73
      %p80 = scmp.eq.s32.totalorder %s28, 3
      %p81 = por %p79, %p80
      %p82 = scmp.ne.s32.totalorder %s73, %s74
      %p83 = scmp.eq.s32.totalorder %s28, 0
      %p84 = por %p82, %p83
      %p85 = scmp.ne.s32.totalorder %s73, %s74
      %p86 = scmp.eq.s32.totalorder %s29, 3
      %p87 = por %p85, %p86
      %p89 = scmp.ne.s32.totalorder %s74, %s88
      %p90 = scmp.eq.s32.totalorder %s29, 0
      %p91 = por %p89, %p90
      %s93 = sadd.s32 %s92, 1
      %p96 = scmp.eq.s32.totalorder %s23, 3
      %p97 = scmp.ne.s32.totalorder %s92, %s94
      %p98 = scmp.eq.s32.totalorder %s23, 0
      %p99 = por %p97, %p98
      %p100 = scmp.ne.s32.totalorder %s92, %s94
      %p101 = scmp.eq.s32.totalorder %s28, 3
      %p102 = por %p100, %p101
      %p103 = scmp.ne.s32.totalorder %s94, %s95
      %p104 = scmp.eq.s32.totalorder %s28, 0
      %p105 = por %p103, %p104
      %p106 = scmp.ne.s32.totalorder %s94, %s95
      %p107 = scmp.eq.s32.totalorder %s29, 3
      %p108 = por %p106, %p107
      %p110 = scmp.ne.s32.totalorder %s95, %s109
      %p111 = scmp.eq.s32.totalorder %s29, 0
      %p112 = por %p110, %p111
      %s114 = sadd.s32 %s113, 1
      %p117 = scmp.eq.s32.totalorder %s23, 3
      %p118 = scmp.ne.s32.totalorder %s113, %s115
      %p119 = scmp.eq.s32.totalorder %s23, 0
      %p120 = por %p118, %p119
      %p121 = scmp.ne.s32.totalorder %s113, %s115
      %p122 = scmp.eq.s32.totalorder %s28, 3
      %p123 = por %p121, %p122
      %p124 = scmp.ne.s32.totalorder %s115, %s116
      %p125 = scmp.eq.s32.totalorder %s28, 0
      %p126 = por %p124, %p125
      %p127 = scmp.ne.s32.totalorder %s115, %s116
      %p128 = scmp.eq.s32.totalorder %s29, 3
      %p129 = por %p127, %p128
      %p131 = scmp.ne.s32.totalorder %s116, %s130
      %p132 = scmp.eq.s32.totalorder %s29, 0
      %p133 = por %p131, %p132
      %s135 = sadd.s32 %s134, 1
      %p138 = scmp.eq.s32.totalorder %s23, 3
      %p139 = scmp.ne.s32.totalorder %s134, %s136
      %p140 = scmp.eq.s32.totalorder %s23, 0
      %p141 = por %p139, %p140
      %p142 = scmp.ne.s32.totalorder %s134, %s136
      %p143 = scmp.eq.s32.totalorder %s28, 3
      %p144 = por %p142, %p143
      %p145 = scmp.ne.s32.totalorder %s136, %s137
      %p146 = scmp.eq.s32.totalorder %s28, 0
      %p147 = por %p145, %p146
      %p148 = scmp.ne.s32.totalorder %s136, %s137
      %p149 = scmp.eq.s32.totalorder %s29, 3
      %p150 = por %p148, %p149
      %p152 = scmp.ne.s32.totalorder %s137, %s151
      %p153 = scmp.eq.s32.totalorder %s29, 0
      %p154 = por %p152, %p153
      %s156 = sadd.s32 %s155, 1
      %p159 = scmp.eq.s32.totalorder %s23, 3
      %p160 = scmp.ne.s32.totalorder %s155, %s157
      %p161 = scmp.eq.s32.totalorder %s23, 0
      %p162 = por %p160, %p161
      %p163 = scmp.ne.s32.totalorder %s155, %s157
      %p164 = scmp.eq.s32.totalorder %s28, 3
      %p165 = por %p163, %p164
      %p166 = scmp.ne.s32.totalorder %s157, %s158
      %p167 = scmp.eq.s32.totalorder %s28, 0
      %p168 = por %p166, %p167
      %p169 = scmp.ne.s32.totalorder %s157, %s158
      %p170 = scmp.eq.s32.totalorder %s29, 3
      %p171 = por %p169, %p170
      %p173 = scmp.ne.s32.totalorder %s158, %s172
      %p174 = scmp.eq.s32.totalorder %s29, 0
      %p175 = por %p173, %p174
      %s177 = sadd.s32 %s176, 1
      %p180 = scmp.eq.s32.totalorder %s23, 3
      %p181 = scmp.ne.s32.totalorder %s176, %s178
      %p182 = scmp.eq.s32.totalorder %s23, 0
      %p183 = por %p181, %p182
      %p184 = scmp.ne.s32.totalorder %s176, %s178
      %p185 = scmp.eq.s32.totalorder %s28, 3
      %p186 = por %p184, %p185
      %p187 = scmp.ne.s32.totalorder %s178, %s179
      %p188 = scmp.eq.s32.totalorder %s28, 0
      %p189 = por %p187, %p188
      %p190 = scmp.ne.s32.totalorder %s178, %s179
      %p191 = scmp.eq.s32.totalorder %s29, 3
      %p192 = por %p190, %p191
      %p194 = scmp.ne.s32.totalorder %s179, %s193
      %p195 = scmp.eq.s32.totalorder %s29, 0
      %p196 = por %p194, %p195
      %s198 = sadd.s32 %s197, 1
      %p201 = scmp.eq.s32.totalorder %s23, 3
      %p202 = scmp.ne.s32.totalorder %s197, %s199
      %p203 = scmp.eq.s32.totalorder %s23, 0
      %p204 = por %p202, %p203
      %p205 = scmp.ne.s32.totalorder %s197, %s199
      %p206 = scmp.eq.s32.totalorder %s28, 3
      %p207 = por %p205, %p206
      %p208 = scmp.ne.s32.totalorder %s199, %s200
      %p209 = scmp.eq.s32.totalorder %s28, 0
      %p210 = por %p208, %p209
      %p211 = scmp.ne.s32.totalorder %s199, %s200
      %p212 = scmp.eq.s32.totalorder %s29, 3
      %p213 = por %p211, %p212
      %p215 = scmp.ne.s32.totalorder %s200, %s214
      %p216 = scmp.eq.s32.totalorder %s29, 0
      %p217 = por %p215, %p216
      %s219 = sadd.s32 %s218, 1
      %p222 = scmp.eq.s32.totalorder %s23, 3
      %p223 = scmp.ne.s32.totalorder %s218, %s220
      %p224 = scmp.eq.s32.totalorder %s23, 0
      %p225 = por %p223, %p224
      %p226 = scmp.ne.s32.totalorder %s218, %s220
      %p227 = scmp.eq.s32.totalorder %s28, 3
      %p228 = por %p226, %p227
      %p229 = scmp.ne.s32.totalorder %s220, %s221
      %p230 = scmp.eq.s32.totalorder %s28, 0
      %p231 = por %p229, %p230
      %p232 = scmp.ne.s32.totalorder %s220, %s221
      %p233 = scmp.eq.s32.totalorder %s29, 3
      %p234 = por %p232, %p233
      %p236 = scmp.ne.s32.totalorder %s221, %s235
      %p237 = scmp.eq.s32.totalorder %s29, 0
      %p238 = por %p236, %p237
      %s240 = sadd.s32 %s239, 1
      %p243 = scmp.eq.s32.totalorder %s23, 3
      %p244 = scmp.ne.s32.totalorder %s239, %s241
      %p245 = scmp.eq.s32.totalorder %s23, 0
      %p246 = por %p244, %p245
      %p247 = scmp.ne.s32.totalorder %s239, %s241
      %p248 = scmp.eq.s32.totalorder %s28, 3
      %p249 = por %p247, %p248
      %p250 = scmp.ne.s32.totalorder %s241, %s242
      %p251 = scmp.eq.s32.totalorder %s28, 0
      %p252 = por %p250, %p251
      %p253 = scmp.ne.s32.totalorder %s241, %s242
      %p254 = scmp.eq.s32.totalorder %s29, 3
      %p255 = por %p253, %p254
      %p257 = scmp.ne.s32.totalorder %s242, %s256
      %p258 = scmp.eq.s32.totalorder %s29, 0
      %p259 = por %p257, %p258
      %s261 = sadd.s32 %s260, 1
      %p264 = scmp.eq.s32.totalorder %s23, 3
      %p265 = scmp.ne.s32.totalorder %s260, %s262
      %p266 = scmp.eq.s32.totalorder %s23, 0
      %p267 = por %p265, %p266
      %p268 = scmp.ne.s32.totalorder %s260, %s262
      %p269 = scmp.eq.s32.totalorder %s28, 3
      %p270 = por %p268, %p269
      %p271 = scmp.ne.s32.totalorder %s262, %s263
      %p272 = scmp.eq.s32.totalorder %s28, 0
      %p273 = por %p271, %p272
      %p274 = scmp.ne.s32.totalorder %s262, %s263
      %p275 = scmp.eq.s32.totalorder %s29, 3
      %p276 = por %p274, %p275
      %p278 = scmp.ne.s32.totalorder %s263, %s277
      %p279 = scmp.eq.s32.totalorder %s29, 0
      %p280 = por %p278, %p279
      %s281 = ssub.s32 %s30, %s42
      %s282 = ssub.s32 %s31, %s38
      %s283 = sor.u32 %s281, %s282
      %p284 = scmp.eq.s32.totalorder %s283, 0
      %s286 = sadd.s32 %s285, 1
      %s287 = scalar_select %p284, %s285, %s286
      %p290 = pneg %p284
      %p291 = scmp.eq.s32.totalorder %s23, 3
      %p292 = por %p290, %p291
      %p293 = scmp.ne.s32.totalorder %s285, %s288
      %p294 = scmp.eq.s32.totalorder %s23, 0
      %p295 = por %p293, %p294
      %p296 = scmp.ne.s32.totalorder %s285, %s288
      %p297 = scmp.eq.s32.totalorder %s28, 3
      %p298 = por %p296, %p297
      %p299 = scmp.ne.s32.totalorder %s288, %s289
      %p300 = scmp.eq.s32.totalorder %s28, 0
      %p301 = por %p299, %p300
      %p302 = scmp.ne.s32.totalorder %s288, %s289
      %p303 = scmp.eq.s32.totalorder %s29, 3
      %p304 = por %p302, %p303
      %p306 = scmp.ne.s32.totalorder %s289, %s305
      %p307 = scmp.eq.s32.totalorder %s29, 0
      %p308 = por %p306, %p307
      %p309 = scmp.le.s32.totalorder 1, %s23
      %p310 = scmp.lt.s32.totalorder %s23, 5
      %p311 = pnand %p309, %p310
      %p312 = pneg %p311
      // Predicated region
      $region9: #{tpu_custom_call.1} parent=5 // pred_check
        _
      $region10: #{tpu_custom_call.1} parent=5 // pred_check_branch
        %314 = sbr.rel (%p311) target = $region12
      $region11: #{tpu_custom_call.1} parent=5 // pred_region
        %s315 = ssub.s32 %s23, 1
        // Predicated region
        $region13: #{tpu_custom_call.1} parent=11 // pred_check
          %p316 = pneg %p84
        $region14: #{tpu_custom_call.1} parent=11 // pred_check_branch
          %318 = sbr.rel (%p316) target = $region16
        $region15: #{tpu_custom_call.1} parent=11 // pred_region
          _
        $region16: #{tpu_custom_call.1} parent=11 // pred_fallthru
          _
        // Predicated region
        $region17: #{tpu_custom_call.1} parent=11 // pred_check
          %p319 = pneg %p105
        $region18: #{tpu_custom_call.1} parent=11 // pred_check_branch
          %321 = sbr.rel (%p319) target = $region20
        $region19: #{tpu_custom_call.1} parent=11 // pred_region
          _
        $region20: #{tpu_custom_call.1} parent=11 // pred_fallthru
          _
        // Predicated region
        $region21: #{tpu_custom_call.1} parent=11 // pred_check
          %p322 = pneg %p126
        $region22: #{tpu_custom_call.1} parent=11 // pred_check_branch
          %324 = sbr.rel (%p322) target = $region24
        $region23: #{tpu_custom_call.1} parent=11 // pred_region
          _
        $region24: #{tpu_custom_call.1} parent=11 // pred_fallthru
          _
        // Predicated region
        $region25: #{tpu_custom_call.1} parent=11 // pred_check
          %p325 = pneg %p147
        $region26: #{tpu_custom_call.1} parent=11 // pred_check_branch
          %327 = sbr.rel (%p325) target = $region28
        $region27: #{tpu_custom_call.1} parent=11 // pred_region
          %s329 = ssub.s32 16, 16
          %330 = vsyncadd [#allocation5], %s329
          %s332 = sshll.u32 [#allocation4], 4
          %s333 = int_to_ptr.vmem [resolvable:$true] %s332
          %335 = dma.hbm_to_vmem [thread:$0]  %s4, 16, %s333, [#allocation5]
        $region28: #{tpu_custom_call.1} parent=11 // pred_fallthru
          _
        // Predicated region
        $region29: #{tpu_custom_call.1} parent=11 // pred_check
          %p336 = pneg %p168
        $region30: #{tpu_custom_call.1} parent=11 // pred_check_branch
          %338 = sbr.rel (%p336) target = $region32
        $region31: #{tpu_custom_call.1} parent=11 // pred_region
          %s340 = ssub.s32 256, 256
          %341 = vsyncadd [#allocation8], %s340
          %s342 = sshll.u32 [#allocation7], 4
          %s343 = int_to_ptr.vmem [resolvable:$true] %s342
          %348 = dma.hbm_to_vmem [thread:$0]  %s5, 256, %s343, [#allocation8], 64, 64, 4
        $region32: #{tpu_custom_call.1} parent=11 // pred_fallthru
          _
        // Predicated region
        $region33: #{tpu_custom_call.1} parent=11 // pred_check
          %p349 = pneg %p189
        $region34: #{tpu_custom_call.1} parent=11 // pred_check_branch
          %351 = sbr.rel (%p349) target = $region36
        $region35: #{tpu_custom_call.1} parent=11 // pred_region
          %s353 = ssub.s32 16, 16
          %354 = vsyncadd [#allocation8], %s353
          %s356 = sshll.u32 [#allocation9], 4
          %s357 = int_to_ptr.vmem [resolvable:$true] %s356
          %359 = dma.hbm_to_vmem [thread:$0]  %s6, 16, %s357, [#allocation8]
        $region36: #{tpu_custom_call.1} parent=11 // pred_fallthru
          _
        // Predicated region
        $region37: #{tpu_custom_call.1} parent=11 // pred_check
          %p360 = pneg %p210
        $region38: #{tpu_custom_call.1} parent=11 // pred_check_branch
          %362 = sbr.rel (%p360) target = $region40
        $region39: #{tpu_custom_call.1} parent=11 // pred_region
          %s364 = ssub.s32 16, 16
          %365 = vsyncadd [#allocation11], %s364
          %s367 = sshll.u32 [#allocation10], 4
          %s368 = int_to_ptr.vmem [resolvable:$true] %s367
          %370 = dma.hbm_to_vmem [thread:$0]  %s7, 16, %s368, [#allocation11]
        $region40: #{tpu_custom_call.1} parent=11 // pred_fallthru
          _
        // Predicated region
        $region41: #{tpu_custom_call.1} parent=11 // pred_check
          %p371 = pneg %p231
        $region42: #{tpu_custom_call.1} parent=11 // pred_check_branch
          %373 = sbr.rel (%p371) target = $region44
        $region43: #{tpu_custom_call.1} parent=11 // pred_region
          %s375 = ssub.s32 16, 16
          %376 = vsyncadd [#allocation11], %s375
          %s378 = sshll.u32 [#allocation12], 4
          %s379 = int_to_ptr.vmem [resolvable:$true] %s378
          %381 = dma.hbm_to_vmem [thread:$0]  %s8, 16, %s379, [#allocation11]
        $region44: #{tpu_custom_call.1} parent=11 // pred_fallthru
          _
        // Predicated region
        $region45: #{tpu_custom_call.1} parent=11 // pred_check
          %p382 = pneg %p252
        $region46: #{tpu_custom_call.1} parent=11 // pred_check_branch
          %384 = sbr.rel (%p382) target = $region48
        $region47: #{tpu_custom_call.1} parent=11 // pred_region
          _
        $region48: #{tpu_custom_call.1} parent=11 // pred_fallthru
          _
        // Predicated region
        $region49: #{tpu_custom_call.1} parent=11 // pred_check
          %p385 = pneg %p273
        $region50: #{tpu_custom_call.1} parent=11 // pred_check_branch
          %387 = sbr.rel (%p385) target = $region52
        $region51: #{tpu_custom_call.1} parent=11 // pred_region
          _
        $region52: #{tpu_custom_call.1} parent=11 // pred_fallthru
          _
      $region12: #{tpu_custom_call.1} parent=5 // pred_fallthru
        _
      %p388 = scmp.lt.s32.totalorder %s23, 4
      // Predicated region
      $region53: #{tpu_custom_call.1} parent=5 // pred_check
        %p389 = pneg %p388
      $region54: #{tpu_custom_call.1} parent=5 // pred_check_branch
        %391 = sbr.rel (%p389) target = $region56
      $region55: #{tpu_custom_call.1} parent=5 // pred_region
        // Predicated region
        $region57: #{tpu_custom_call.1} parent=55 // pred_check
          %p392 = pneg %p57
        $region58: #{tpu_custom_call.1} parent=55 // pred_check_branch
          %394 = sbr.rel (%p392) target = $region60
        $region59: #{tpu_custom_call.1} parent=55 // pred_region
          %p395 = scmp.lt.s32.totalorder %s30, 1
          %s396 = scalar_select %p395, %s30, 1
          %p397 = scmp.lt.s32.totalorder %s31, 1
          %s398 = scalar_select %p397, %s31, 1
          %s399 = smul.addr %s396, 2
          %s400 = sadd.s32 %s398, %s399
          %s401 = smul.addr %s400, 8
          %s402 = scalar_lea.vmem %s0, %s401
        $region60: #{tpu_custom_call.1} parent=55 // pred_fallthru
          _
      $region56: #{tpu_custom_call.1} parent=5 // pred_fallthru
        _
      %p403 = scmp.le.s32.totalorder 1, %s23
      %p404 = scmp.lt.s32.totalorder %s23, 5
      %p405 = pnand %p403, %p404
      %p406 = pneg %p405
      // Predicated region
      $region61: #{tpu_custom_call.1} parent=5 // pred_check
        _
      $region62: #{tpu_custom_call.1} parent=5 // pred_check_branch
        %408 = sbr.rel (%p405) target = $region64
      $region63: #{tpu_custom_call.1} parent=5 // pred_region
        %s409 = ssub.s32 %s23, 1
        // Predicated region
        $region65: #{tpu_custom_call.1} parent=63 // pred_check
          %p410 = pneg %p147
        $region66: #{tpu_custom_call.1} parent=63 // pred_check_branch
          %412 = sbr.rel (%p410) target = $region68
        $region67: #{tpu_custom_call.1} parent=63 // pred_region
          %413 = dma.done [#allocation5], 16
        $region68: #{tpu_custom_call.1} parent=63 // pred_fallthru
          _
        // Predicated region
        $region69: #{tpu_custom_call.1} parent=63 // pred_check
          %p414 = pneg %p168
        $region70: #{tpu_custom_call.1} parent=63 // pred_check_branch
          %416 = sbr.rel (%p414) target = $region72
        $region71: #{tpu_custom_call.1} parent=63 // pred_region
          %417 = dma.done [#allocation8], 256
        $region72: #{tpu_custom_call.1} parent=63 // pred_fallthru
          _
        // Predicated region
        $region73: #{tpu_custom_call.1} parent=63 // pred_check
          %p418 = pneg %p189
        $region74: #{tpu_custom_call.1} parent=63 // pred_check_branch
          %420 = sbr.rel (%p418) target = $region76
        $region75: #{tpu_custom_call.1} parent=63 // pred_region
          %421 = dma.done [#allocation8], 16
        $region76: #{tpu_custom_call.1} parent=63 // pred_fallthru
          _
        // Predicated region
        $region77: #{tpu_custom_call.1} parent=63 // pred_check
          %p422 = pneg %p210
        $region78: #{tpu_custom_call.1} parent=63 // pred_check_branch
          %424 = sbr.rel (%p422) target = $region80
        $region79: #{tpu_custom_call.1} parent=63 // pred_region
          %425 = dma.done [#allocation11], 16
        $region80: #{tpu_custom_call.1} parent=63 // pred_fallthru
          _
        // Predicated region
        $region81: #{tpu_custom_call.1} parent=63 // pred_check
          %p426 = pneg %p231
        $region82: #{tpu_custom_call.1} parent=63 // pred_check_branch
          %428 = sbr.rel (%p426) target = $region84
        $region83: #{tpu_custom_call.1} parent=63 // pred_region
          %429 = dma.done [#allocation11], 16
        $region84: #{tpu_custom_call.1} parent=63 // pred_fallthru
          _
        %p430 = scmp.lt.s32.totalorder %s32, 1
        %s431 = scalar_select %p430, %s32, 1
        %p432 = scmp.lt.s32.totalorder %s33, 1
        %s433 = scalar_select %p432, %s33, 1
        %s434 = smul.addr %s431, 2
        %s435 = sadd.s32 %s433, %s434
        %s436 = smul.addr %s435, 8
        %s437 = scalar_lea.vmem %s0, %s436
        %p438 = pneg %p63
        %p439 = pneg %p60
        %p440 = pneg %p84
        %p441 = pneg %p81
        %p442 = pneg %p105
        %p443 = pneg %p102
        %p444 = pneg %p126
        %p445 = pneg %p123
        %p446 = pneg %p147
        %p447 = pneg %p144
        %p448 = pneg %p168
        %p449 = pneg %p165
        %p450 = pneg %p189
        %p451 = pneg %p186
        %p452 = pneg %p210
        %p453 = pneg %p207
        %p454 = pneg %p231
        %p455 = pneg %p228
        %p456 = pneg %p252
        %p457 = pneg %p249
        %p458 = pneg %p273
        %p459 = pneg %p270
        %p460 = pneg %p301
        %p461 = pneg %p298
        %s462 = sand.u32 %s288, 1
        %s463 = scalar_lea.sflag [#allocation6], %s462
        %s464 = sand.u32 %s288, 1
        %s465 = smul.addr %s464, 8
        %s466 = scalar_lea.vmem [#allocation13], %s465
        %p467 = scmp.lt.s32.totalorder %s32, 1
        %s468 = scalar_select %p467, %s32, 1
        %p469 = scmp.lt.s32.totalorder %s33, 1
        %s470 = scalar_select %p469, %s33, 1
        %s471 = smul.addr %s468, 2
        %s472 = sadd.s32 %s470, %s471
        %s473 = smul.addr %s472, 8
        %s474 = scalar_lea.vmem %s0, %s473
        %v476 = vld [vmem:[%s474] sm:$0xff]
        %v477 = vld [vmem:[%s1] sm:$0x1]
        %v478 = vld [vmem:[%s2] sm:$0x1]
        %vm479 = vcmask 261120
        %v480 = vsel %vm479, %v476, 0.0
        %481 = vadd.xlane.f32.xlu0 %v480
        %v482 = vpop.xlane.xlu0 %481
        %v483 = vrcp.pop 32.0
        %v484 = vmul.f32 %v482, %v483
        %v485 = vsub.f32 %v476, %v484
        %v486 = vmul.f32 %v485, %v485
        %v487 = vsel %vm479, %v486, 0.0
        %488 = vadd.xlane.f32.xlu0 %v487
        %v489 = vpop.xlane.xlu0 %488
        %v490 = vmul.f32 %v489, %v483
        %v491 = vadd.f32 %v490, 1e-05
        %v492 = vrsqrt.pop %v491
        %v493 = vmul.f32 %v485, %v492
        %v495 = vlaneseq
        %v496 = vshrl.u32 %v495, 7
        %v497 = vsub.s32 0, %v496
        %v498 = vrot.slane %v477, %v497
        %v500 = vmul.f32 %v493, %v498
        %v502 = vlaneseq
        %v503 = vshrl.u32 %v502, 7
        %v504 = vsub.s32 0, %v503
        %v505 = vrot.slane %v478, %v504
        %v507 = vadd.f32 %v500, %v505
        %v508 = vpack.c.bf16 %v507, %v507
        %v509 = vld [vmem:[%s3] sm:$0xf]
        %v510 = vld [vmem:[%s3 + $0x4] sm:$0xf]
        %v511 = vld [vmem:[%s3 + $0x8] sm:$0xf]
        %v512 = vld [vmem:[%s3 + $0xc] sm:$0xf]
        %v513 = vld [vmem:[#allocation4] sm:$0x1]
        %v515 = vlaneseq
        %v516 = vshrl.u32 %v515, 7
        %v517 = vsub.s32 0, %v516
        %v518 = vrot.slane %v513, %v517
        %v524 = vunpack.c.l.b16 %v509
        %v525 = vunpack.c.l.b16 %v510
        %v526 = vunpack.c.l.b16 %v511
        %v527 = vunpack.c.l.b16 %v512
        %v528 = vpack.c.b16 %v525, %v524
        %v529 = vpack.c.b16 %v527, %v526
        %v533 = vsel %vm479, %v508, 0
        %535 = vmatprep.subr.bf16.mxu0 0
        %536 = vmatpush1.bf16.msra.mxu0 0
        %537 = vmatprep.subr.bf16.mxu0 0
        %538 = vmatpush1.bf16.msra.mxu0 0
        %539 = vmatprep.subr.bf16.mxu0 0
        %540 = vmatpush1.bf16.msra.mxu0 0
        %541 = vmatprep.subr.bf16.mxu0 0
        %542 = vmatpush1.bf16.msra.mxu0 0
        %543 = vmatprep.subr.bf16.mxu0 0
        %544 = vmatpush1.bf16.msra.mxu0 0
        %545 = vmatprep.subr.bf16.mxu0 0
        %546 = vmatpush1.bf16.msra.mxu0 0
        %547 = vmatprep.subr.bf16.mxu0 0
        %548 = vmatpush1.bf16.msra.mxu0 %v529
        %549 = vmatprep.subr.bf16.mxu0 0
        %550 = vmatpush1.bf16.msra.mxu0 %v528
        %551 = vmatprep.subr.bf16.mxu0 0
        %552 = vmatpush2.bf16.msra.mxu0 0
        %553 = vmatprep.subr.bf16.mxu0 0
        %554 = vmatpush2.bf16.msra.mxu0 0
        %555 = vmatprep.subr.bf16.mxu0 0
        %556 = vmatpush2.bf16.msra.mxu0 0
        %557 = vmatprep.subr.bf16.mxu0 0
        %558 = vmatpush2.bf16.msra.mxu0 0
        %559 = vmatprep.subr.bf16.mxu0 0
        %560 = vmatpush2.bf16.msra.mxu0 0
        %561 = vmatprep.subr.bf16.mxu0 0
        %562 = vmatpush2.bf16.msra.mxu0 0
        %563 = vmatprep.subr.bf16.mxu0 0
        %564 = vmatpush2.bf16.msra.mxu0 0
        %565 = vmatprep.subr.bf16.mxu0 0
        %566 = vmatpush2.bf16.msra.mxu0 0
        %567 = vmatprep.mubr.bf16.mxu0 0
        %568 = vmatmul.mubr.bf16.gmra.mxu0 %v533
        %v569 = vpop.f32.mrf.mxu0
        %v570 = vadd.f32 %v518, %v569
        %v571 = vpop.f32.mrf.mxu0
        %v572 = vpop.f32.mrf.mxu0
        %v573 = vpop.f32.mrf.mxu0
        %574 = vdwg.mxu0
        %v575 = vpack.c.bf16 %v570, %v570
        %577 = vrot.lane.b32.xlu0 %v575, 120
        %v578 = vpop.permute.xlu0 %577
        %579 = vrot.lane.b32.xlu0 %v575, 112
        %v580 = vpop.permute.xlu0 %579
        %581 = vrot.lane.b32.xlu0 %v575, 104
        %v582 = vpop.permute.xlu0 %581
        %v583 = vunpack.c.l.b16 %v575
        %v584 = vunpack.c.l.b16 %v578
        %v585 = vunpack.c.l.b16 %v580
        %v586 = vunpack.c.l.b16 %v582
        %v587 = vpack.c.b16 %v583, %v583
        %v588 = vpack.c.b16 %v584, %v584
        %v589 = vpack.c.b16 %v585, %v585
        %v590 = vpack.c.b16 %v586, %v586
        %591 = vrot.lane.b32.xlu0 %v587, 96
        %v592 = vpop.permute.xlu0 %591
        %593 = vrot.lane.b32.xlu0 %v588, 96
        %v594 = vpop.permute.xlu0 %593
        %595 = vrot.lane.b32.xlu0 %v589, 96
        %v596 = vpop.permute.xlu0 %595
        %597 = vrot.lane.b32.xlu0 %v590, 96
        %v598 = vpop.permute.xlu0 %597
        %s603 = smul.u32 %s33, 4
        %s604 = smul.addr %s603, 4
        %s605 = scalar_lea.vmem [#allocation2], %s604
        %vm606 = vcmask 60416
        %607 = vst.msk [vmem:[%s605] sm:$0xf] %vm606, %v592
        %608 = vst.msk [vmem:[%s605 + $0x4] sm:$0xf] %vm606, %v594
        %609 = vst.msk [vmem:[%s605 + $0x8] sm:$0xf] %vm606, %v596
        %610 = vst.msk [vmem:[%s605 + $0xc] sm:$0xf] %vm606, %v598
        %611 = vrot.lane.b32.xlu0 %v587, 64
        %v612 = vpop.permute.xlu0 %611
        %613 = vrot.lane.b32.xlu0 %v588, 64
        %v614 = vpop.permute.xlu0 %613
        %615 = vrot.lane.b32.xlu0 %v589, 64
        %v616 = vpop.permute.xlu0 %615
        %617 = vrot.lane.b32.xlu0 %v590, 64
        %v618 = vpop.permute.xlu0 %617
        %s623 = smul.addr %s603, 4
        %s624 = scalar_lea.vmem [#allocation3], %s623
        %625 = vst.msk [vmem:[%s624] sm:$0xf] %vm606, %v612
        %626 = vst.msk [vmem:[%s624 + $0x4] sm:$0xf] %vm606, %v614
        %627 = vst.msk [vmem:[%s624 + $0x8] sm:$0xf] %vm606, %v616
        %628 = vst.msk [vmem:[%s624 + $0xc] sm:$0xf] %vm606, %v618
        %v629 = vlaneseq
        %v630 = vand.u32 %v629, 127
        %v631 = vlaneseq
        %v632 = vshrl.u32 %v631, 7
        %vm633 = vcmp.le.s32.totalorder %v630, %v632
        %634 = vrot.lane.b32.xlu0 %v575, 96
        %v635 = vpop.permute.xlu0 %634
        %vm636 = vcmask 64512
        %v638 = vsel %vm636, %v575, 0
        %v641 = vsel %vm636, %v635, 0
        %643 = vmatprep.subr.bf16.mxu0 0
        %644 = vmatpush1.bf16.xpose.msra.mxu0 0
        %645 = vmatprep.subr.bf16.mxu0 0
        %646 = vmatpush1.bf16.xpose.msra.mxu0 0
        %647 = vmatprep.subr.bf16.mxu0 0
        %648 = vmatpush1.bf16.xpose.msra.mxu0 0
        %649 = vmatprep.subr.bf16.mxu0 0
        %650 = vmatpush1.bf16.xpose.msra.mxu0 0
        %651 = vmatprep.subr.bf16.mxu0 0
        %652 = vmatpush1.bf16.xpose.msra.mxu0 0
        %653 = vmatprep.subr.bf16.mxu0 0
        %654 = vmatpush1.bf16.xpose.msra.mxu0 0
        %655 = vmatprep.subr.bf16.mxu0 0
        %656 = vmatpush1.bf16.xpose.msra.mxu0 0
        %657 = vmatprep.subr.bf16.mxu0 0
        %658 = vmatpush1.bf16.xpose.msra.mxu0 %v641
        %659 = vmatprep.subr.bf16.mxu0 0
        %660 = vmatpush2.bf16.xpose.msra.mxu0 0
        %661 = vmatprep.subr.bf16.mxu0 0
        %662 = vmatpush2.bf16.xpose.msra.mxu0 0
        %663 = vmatprep.subr.bf16.mxu0 0
        %664 = vmatpush2.bf16.xpose.msra.mxu0 0
        %665 = vmatprep.subr.bf16.mxu0 0
        %666 = vmatpush2.bf16.xpose.msra.mxu0 0
        %667 = vmatprep.subr.bf16.mxu0 0
        %668 = vmatpush2.bf16.xpose.msra.mxu0 0
        %669 = vmatprep.subr.bf16.mxu0 0
        %670 = vmatpush2.bf16.xpose.msra.mxu0 0
        %671 = vmatprep.subr.bf16.mxu0 0
        %672 = vmatpush2.bf16.xpose.msra.mxu0 0
        %673 = vmatprep.subr.bf16.mxu0 0
        %674 = vmatpush2.bf16.xpose.msra.mxu0 0
        %675 = vmatprep.mubr.bf16.mxu0 0
        %676 = vmatmul.mubr.bf16.gmra.mxu0 %v638
        %v677 = vpop.f32.mrf.mxu0
        %v678 = vadd.f32 0.0, %v677
        %v679 = vpop.f32.mrf.mxu0
        %v680 = vpop.f32.mrf.mxu0
        %v681 = vpop.f32.mrf.mxu0
        %682 = vdwg.mxu0
        %683 = vrot.lane.b32.xlu0 %v578, 96
        %v684 = vpop.permute.xlu0 %683
        %v686 = vsel %vm636, %v578, 0
        %v689 = vsel %vm636, %v684, 0
        %691 = vmatprep.subr.bf16.mxu0 0
        %692 = vmatpush1.bf16.xpose.msra.mxu0 0
        %693 = vmatprep.subr.bf16.mxu0 0
        %694 = vmatpush1.bf16.xpose.msra.mxu0 0
        %695 = vmatprep.subr.bf16.mxu0 0
        %696 = vmatpush1.bf16.xpose.msra.mxu0 0
        %697 = vmatprep.subr.bf16.mxu0 0
        %698 = vmatpush1.bf16.xpose.msra.mxu0 0
        %699 = vmatprep.subr.bf16.mxu0 0
        %700 = vmatpush1.bf16.xpose.msra.mxu0 0
        %701 = vmatprep.subr.bf16.mxu0 0
        %702 = vmatpush1.bf16.xpose.msra.mxu0 0
        %703 = vmatprep.subr.bf16.mxu0 0
        %704 = vmatpush1.bf16.xpose.msra.mxu0 0
        %705 = vmatprep.subr.bf16.mxu0 0
        %706 = vmatpush1.bf16.xpose.msra.mxu0 %v689
        %707 = vmatprep.subr.bf16.mxu0 0
        %708 = vmatpush2.bf16.xpose.msra.mxu0 0
        %709 = vmatprep.subr.bf16.mxu0 0
        %710 = vmatpush2.bf16.xpose.msra.mxu0 0
        %711 = vmatprep.subr.bf16.mxu0 0
        %712 = vmatpush2.bf16.xpose.msra.mxu0 0
        %713 = vmatprep.subr.bf16.mxu0 0
        %714 = vmatpush2.bf16.xpose.msra.mxu0 0
        %715 = vmatprep.subr.bf16.mxu0 0
        %716 = vmatpush2.bf16.xpose.msra.mxu0 0
        %717 = vmatprep.subr.bf16.mxu0 0
        %718 = vmatpush2.bf16.xpose.msra.mxu0 0
        %719 = vmatprep.subr.bf16.mxu0 0
        %720 = vmatpush2.bf16.xpose.msra.mxu0 0
        %721 = vmatprep.subr.bf16.mxu0 0
        %722 = vmatpush2.bf16.xpose.msra.mxu0 0
        %723 = vmatprep.mubr.bf16.mxu0 0
        %724 = vmatmul.mubr.bf16.gmra.mxu0 %v686
        %v725 = vpop.f32.mrf.mxu0
        %v726 = vadd.f32 0.0, %v725
        %v727 = vpop.f32.mrf.mxu0
        %v728 = vpop.f32.mrf.mxu0
        %v729 = vpop.f32.mrf.mxu0
        %730 = vdwg.mxu0
        %731 = vrot.lane.b32.xlu0 %v580, 96
        %v732 = vpop.permute.xlu0 %731
        %v734 = vsel %vm636, %v580, 0
        %v737 = vsel %vm636, %v732, 0
        %739 = vmatprep.subr.bf16.mxu0 0
        %740 = vmatpush1.bf16.xpose.msra.mxu0 0
        %741 = vmatprep.subr.bf16.mxu0 0
        %742 = vmatpush1.bf16.xpose.msra.mxu0 0
        %743 = vmatprep.subr.bf16.mxu0 0
        %744 = vmatpush1.bf16.xpose.msra.mxu0 0
        %745 = vmatprep.subr.bf16.mxu0 0
        %746 = vmatpush1.bf16.xpose.msra.mxu0 0
        %747 = vmatprep.subr.bf16.mxu0 0
        %748 = vmatpush1.bf16.xpose.msra.mxu0 0
        %749 = vmatprep.subr.bf16.mxu0 0
        %750 = vmatpush1.bf16.xpose.msra.mxu0 0
        %751 = vmatprep.subr.bf16.mxu0 0
        %752 = vmatpush1.bf16.xpose.msra.mxu0 0
        %753 = vmatprep.subr.bf16.mxu0 0
        %754 = vmatpush1.bf16.xpose.msra.mxu0 %v737
        %755 = vmatprep.subr.bf16.mxu0 0
        %756 = vmatpush2.bf16.xpose.msra.mxu0 0
        %757 = vmatprep.subr.bf16.mxu0 0
        %758 = vmatpush2.bf16.xpose.msra.mxu0 0
        %759 = vmatprep.subr.bf16.mxu0 0
        %760 = vmatpush2.bf16.xpose.msra.mxu0 0
        %761 = vmatprep.subr.bf16.mxu0 0
        %762 = vmatpush2.bf16.xpose.msra.mxu0 0
        %763 = vmatprep.subr.bf16.mxu0 0
        %764 = vmatpush2.bf16.xpose.msra.mxu0 0
        %765 = vmatprep.subr.bf16.mxu0 0
        %766 = vmatpush2.bf16.xpose.msra.mxu0 0
        %767 = vmatprep.subr.bf16.mxu0 0
        %768 = vmatpush2.bf16.xpose.msra.mxu0 0
        %769 = vmatprep.subr.bf16.mxu0 0
        %770 = vmatpush2.bf16.xpose.msra.mxu0 0
        %771 = vmatprep.mubr.bf16.mxu0 0
        %772 = vmatmul.mubr.bf16.gmra.mxu0 %v734
        %v773 = vpop.f32.mrf.mxu0
        %v774 = vadd.f32 0.0, %v773
        %v775 = vpop.f32.mrf.mxu0
        %v776 = vpop.f32.mrf.mxu0
        %v777 = vpop.f32.mrf.mxu0
        %778 = vdwg.mxu0
        %779 = vrot.lane.b32.xlu0 %v582, 96
        %v780 = vpop.permute.xlu0 %779
        %v782 = vsel %vm636, %v582, 0
        %v785 = vsel %vm636, %v780, 0
        %787 = vmatprep.subr.bf16.mxu0 0
        %788 = vmatpush1.bf16.xpose.msra.mxu0 0
        %789 = vmatprep.subr.bf16.mxu0 0
        %790 = vmatpush1.bf16.xpose.msra.mxu0 0
        %791 = vmatprep.subr.bf16.mxu0 0
        %792 = vmatpush1.bf16.xpose.msra.mxu0 0
        %793 = vmatprep.subr.bf16.mxu0 0
        %794 = vmatpush1.bf16.xpose.msra.mxu0 0
        %795 = vmatprep.subr.bf16.mxu0 0
        %796 = vmatpush1.bf16.xpose.msra.mxu0 0
        %797 = vmatprep.subr.bf16.mxu0 0
        %798 = vmatpush1.bf16.xpose.msra.mxu0 0
        %799 = vmatprep.subr.bf16.mxu0 0
        %800 = vmatpush1.bf16.xpose.msra.mxu0 0
        %801 = vmatprep.subr.bf16.mxu0 0
        %802 = vmatpush1.bf16.xpose.msra.mxu0 %v785
        %803 = vmatprep.subr.bf16.mxu0 0
        %804 = vmatpush2.bf16.xpose.msra.mxu0 0
        %805 = vmatprep.subr.bf16.mxu0 0
        %806 = vmatpush2.bf16.xpose.msra.mxu0 0
        %807 = vmatprep.subr.bf16.mxu0 0
        %808 = vmatpush2.bf16.xpose.msra.mxu0 0
        %809 = vmatprep.subr.bf16.mxu0 0
        %810 = vmatpush2.bf16.xpose.msra.mxu0 0
        %811 = vmatprep.subr.bf16.mxu0 0
        %812 = vmatpush2.bf16.xpose.msra.mxu0 0
        %813 = vmatprep.subr.bf16.mxu0 0
        %814 = vmatpush2.bf16.xpose.msra.mxu0 0
        %815 = vmatprep.subr.bf16.mxu0 0
        %816 = vmatpush2.bf16.xpose.msra.mxu0 0
        %817 = vmatprep.subr.bf16.mxu0 0
        %818 = vmatpush2.bf16.xpose.msra.mxu0 0
        %819 = vmatprep.mubr.bf16.mxu0 0
        %820 = vmatmul.mubr.bf16.gmra.mxu0 %v782
        %v821 = vpop.f32.mrf.mxu0
        %v822 = vadd.f32 0.0, %v821
        %v823 = vpop.f32.mrf.mxu0
        %v824 = vpop.f32.mrf.mxu0
        %v825 = vpop.f32.mrf.mxu0
        %826 = vdwg.mxu0
        %v827 = vsel %vm633, 1, 0
        %vm828 = vcmp.eq.s32.totalorder %v827, 1
        %v829 = vsel %vm828, %v678, -1e+30
        %v830 = vsel %vm828, %v726, -1e+30
        %v831 = vsel %vm828, %v774, -1e+30
        %v832 = vsel %vm828, %v822, -1e+30
        %v833 = vsel %vm636, %v829, -inf
        %834 = vmax.xlane.f32.xlu0 %v833
        %v835 = vpop.xlane.xlu0 %834
        %v836 = vsel %vm636, %v830, -inf
        %837 = vmax.xlane.f32.xlu0 %v836
        %v838 = vpop.xlane.xlu0 %837
        %v839 = vsel %vm636, %v831, -inf
        %840 = vmax.xlane.f32.xlu0 %v839
        %v841 = vpop.xlane.xlu0 %840
        %v842 = vsel %vm636, %v832, -inf
        %843 = vmax.xlane.f32.xlu0 %v842
        %v844 = vpop.xlane.xlu0 %843
        %v845 = vsub.f32 %v829, %v835
        %v846 = vsub.f32 %v830, %v838
        %v847 = vsub.f32 %v831, %v841
        %v848 = vsub.f32 %v832, %v844
        %v849 = vmul.f32 %v845, 1.442695
        %v850 = vpow.pop %v849
        %v851 = vmul.f32 %v846, 1.442695
        %v852 = vpow.pop %v851
        %v853 = vmul.f32 %v847, 1.442695
        %v854 = vpow.pop %v853
        %v855 = vmul.f32 %v848, 1.442695
        %v856 = vpow.pop %v855
        %v857 = vsel %vm636, %v850, 0.0
        %858 = vadd.xlane.f32.xlu0 %v857
        %v859 = vpop.xlane.xlu0 %858
        %v860 = vsel %vm636, %v852, 0.0
        %861 = vadd.xlane.f32.xlu0 %v860
        %v862 = vpop.xlane.xlu0 %861
        %v863 = vsel %vm636, %v854, 0.0
        %864 = vadd.xlane.f32.xlu0 %v863
        %v865 = vpop.xlane.xlu0 %864
        %v866 = vsel %vm636, %v856, 0.0
        %867 = vadd.xlane.f32.xlu0 %v866
        %v868 = vpop.xlane.xlu0 %867
        %v869 = vpack.c.bf16 %v850, %v850
        %v870 = vpack.c.bf16 %v852, %v852
        %v871 = vpack.c.bf16 %v854, %v854
        %v872 = vpack.c.bf16 %v856, %v856
        %873 = vrot.lane.b32.xlu0 %v575, 64
        %v874 = vpop.permute.xlu0 %873
        %v876 = vsel %vm636, %v869, 0
        %vm878 = vcmask 1043456
        %v880 = vsel %vm878, %v874, 0
        %882 = vmatprep.subr.bf16.mxu0 0
        %883 = vmatpush1.bf16.msra.mxu0 0
        %884 = vmatprep.subr.bf16.mxu0 0
        %885 = vmatpush1.bf16.msra.mxu0 0
        %886 = vmatprep.subr.bf16.mxu0 0
        %887 = vmatpush1.bf16.msra.mxu0 0
        %888 = vmatprep.subr.bf16.mxu0 0
        %889 = vmatpush1.bf16.msra.mxu0 0
        %890 = vmatprep.subr.bf16.mxu0 0
        %891 = vmatpush1.bf16.msra.mxu0 0
        %892 = vmatprep.subr.bf16.mxu0 0
        %893 = vmatpush1.bf16.msra.mxu0 0
        %894 = vmatprep.subr.bf16.mxu0 0
        %895 = vmatpush1.bf16.msra.mxu0 0
        %896 = vmatprep.subr.bf16.mxu0 0
        %897 = vmatpush1.bf16.msra.mxu0 %v880
        %898 = vmatprep.subr.bf16.mxu0 0
        %899 = vmatpush2.bf16.msra.mxu0 0
        %900 = vmatprep.subr.bf16.mxu0 0
        %901 = vmatpush2.bf16.msra.mxu0 0
        %902 = vmatprep.subr.bf16.mxu0 0
        %903 = vmatpush2.bf16.msra.mxu0 0
        %904 = vmatprep.subr.bf16.mxu0 0
        %905 = vmatpush2.bf16.msra.mxu0 0
        %906 = vmatprep.subr.bf16.mxu0 0
        %907 = vmatpush2.bf16.msra.mxu0 0
        %908 = vmatprep.subr.bf16.mxu0 0
        %909 = vmatpush2.bf16.msra.mxu0 0
        %910 = vmatprep.subr.bf16.mxu0 0
        %911 = vmatpush2.bf16.msra.mxu0 0
        %912 = vmatprep.subr.bf16.mxu0 0
        %913 = vmatpush2.bf16.msra.mxu0 0
        %914 = vmatprep.mubr.bf16.mxu0 0
        %915 = vmatmul.mubr.bf16.gmra.mxu0 %v876
        %v916 = vpop.f32.mrf.mxu0
        %v917 = vadd.f32 0.0, %v916
        %v918 = vpop.f32.mrf.mxu0
        %v919 = vpop.f32.mrf.mxu0
        %v920 = vpop.f32.mrf.mxu0
        %921 = vdwg.mxu0
        %922 = vrot.lane.b32.xlu0 %v578, 64
        %v923 = vpop.permute.xlu0 %922
        %v925 = vsel %vm636, %v870, 0
        %v928 = vsel %vm878, %v923, 0
        %930 = vmatprep.subr.bf16.mxu0 0
        %931 = vmatpush1.bf16.msra.mxu0 0
        %932 = vmatprep.subr.bf16.mxu0 0
        %933 = vmatpush1.bf16.msra.mxu0 0
        %934 = vmatprep.subr.bf16.mxu0 0
        %935 = vmatpush1.bf16.msra.mxu0 0
        %936 = vmatprep.subr.bf16.mxu0 0
        %937 = vmatpush1.bf16.msra.mxu0 0
        %938 = vmatprep.subr.bf16.mxu0 0
        %939 = vmatpush1.bf16.msra.mxu0 0
        %940 = vmatprep.subr.bf16.mxu0 0
        %941 = vmatpush1.bf16.msra.mxu0 0
        %942 = vmatprep.subr.bf16.mxu0 0
        %943 = vmatpush1.bf16.msra.mxu0 0
        %944 = vmatprep.subr.bf16.mxu0 0
        %945 = vmatpush1.bf16.msra.mxu0 %v928
        %946 = vmatprep.subr.bf16.mxu0 0
        %947 = vmatpush2.bf16.msra.mxu0 0
        %948 = vmatprep.subr.bf16.mxu0 0
        %949 = vmatpush2.bf16.msra.mxu0 0
        %950 = vmatprep.subr.bf16.mxu0 0
        %951 = vmatpush2.bf16.msra.mxu0 0
        %952 = vmatprep.subr.bf16.mxu0 0
        %953 = vmatpush2.bf16.msra.mxu0 0
        %954 = vmatprep.subr.bf16.mxu0 0
        %955 = vmatpush2.bf16.msra.mxu0 0
        %956 = vmatprep.subr.bf16.mxu0 0
        %957 = vmatpush2.bf16.msra.mxu0 0
        %958 = vmatprep.subr.bf16.mxu0 0
        %959 = vmatpush2.bf16.msra.mxu0 0
        %960 = vmatprep.subr.bf16.mxu0 0
        %961 = vmatpush2.bf16.msra.mxu0 0
        %962 = vmatprep.mubr.bf16.mxu0 0
        %963 = vmatmul.mubr.bf16.gmra.mxu0 %v925
        %v964 = vpop.f32.mrf.mxu0
        %v965 = vadd.f32 0.0, %v964
        %v966 = vpop.f32.mrf.mxu0
        %v967 = vpop.f32.mrf.mxu0
        %v968 = vpop.f32.mrf.mxu0
        %969 = vdwg.mxu0
        %970 = vrot.lane.b32.xlu0 %v580, 64
        %v971 = vpop.permute.xlu0 %970
        %v973 = vsel %vm636, %v871, 0
        %v976 = vsel %vm878, %v971, 0
        %978 = vmatprep.subr.bf16.mxu0 0
        %979 = vmatpush1.bf16.msra.mxu0 0
        %980 = vmatprep.subr.bf16.mxu0 0
        %981 = vmatpush1.bf16.msra.mxu0 0
        %982 = vmatprep.subr.bf16.mxu0 0
        %983 = vmatpush1.bf16.msra.mxu0 0
        %984 = vmatprep.subr.bf16.mxu0 0
        %985 = vmatpush1.bf16.msra.mxu0 0
        %986 = vmatprep.subr.bf16.mxu0 0
        %987 = vmatpush1.bf16.msra.mxu0 0
        %988 = vmatprep.subr.bf16.mxu0 0
        %989 = vmatpush1.bf16.msra.mxu0 0
        %990 = vmatprep.subr.bf16.mxu0 0
        %991 = vmatpush1.bf16.msra.mxu0 0
        %992 = vmatprep.subr.bf16.mxu0 0
        %993 = vmatpush1.bf16.msra.mxu0 %v976
        %994 = vmatprep.subr.bf16.mxu0 0
        %995 = vmatpush2.bf16.msra.mxu0 0
        %996 = vmatprep.subr.bf16.mxu0 0
        %997 = vmatpush2.bf16.msra.mxu0 0
        %998 = vmatprep.subr.bf16.mxu0 0
        %999 = vmatpush2.bf16.msra.mxu0 0
        %1000 = vmatprep.subr.bf16.mxu0 0
        %1001 = vmatpush2.bf16.msra.mxu0 0
        %1002 = vmatprep.subr.bf16.mxu0 0
        %1003 = vmatpush2.bf16.msra.mxu0 0
        %1004 = vmatprep.subr.bf16.mxu0 0
        %1005 = vmatpush2.bf16.msra.mxu0 0
        %1006 = vmatprep.subr.bf16.mxu0 0
        %1007 = vmatpush2.bf16.msra.mxu0 0
        %1008 = vmatprep.subr.bf16.mxu0 0
        %1009 = vmatpush2.bf16.msra.mxu0 0
        %1010 = vmatprep.mubr.bf16.mxu0 0
        %1011 = vmatmul.mubr.bf16.gmra.mxu0 %v973
        %v1012 = vpop.f32.mrf.mxu0
        %v1013 = vadd.f32 0.0, %v1012
        %v1014 = vpop.f32.mrf.mxu0
        %v1015 = vpop.f32.mrf.mxu0
        %v1016 = vpop.f32.mrf.mxu0
        %1017 = vdwg.mxu0
        %1018 = vrot.lane.b32.xlu0 %v582, 64
        %v1019 = vpop.permute.xlu0 %1018
        %v1021 = vsel %vm636, %v872, 0
        %v1024 = vsel %vm878, %v1019, 0
        %1026 = vmatprep.subr.bf16.mxu0 0
        %1027 = vmatpush1.bf16.msra.mxu0 0
        %1028 = vmatprep.subr.bf16.mxu0 0
        %1029 = vmatpush1.bf16.msra.mxu0 0
        %1030 = vmatprep.subr.bf16.mxu0 0
        %1031 = vmatpush1.bf16.msra.mxu0 0
        %1032 = vmatprep.subr.bf16.mxu0 0
        %1033 = vmatpush1.bf16.msra.mxu0 0
        %1034 = vmatprep.subr.bf16.mxu0 0
        %1035 = vmatpush1.bf16.msra.mxu0 0
        %1036 = vmatprep.subr.bf16.mxu0 0
        %1037 = vmatpush1.bf16.msra.mxu0 0
        %1038 = vmatprep.subr.bf16.mxu0 0
        %1039 = vmatpush1.bf16.msra.mxu0 0
        %1040 = vmatprep.subr.bf16.mxu0 0
        %1041 = vmatpush1.bf16.msra.mxu0 %v1024
        %1042 = vmatprep.subr.bf16.mxu0 0
        %1043 = vmatpush2.bf16.msra.mxu0 0
        %1044 = vmatprep.subr.bf16.mxu0 0
        %1045 = vmatpush2.bf16.msra.mxu0 0
        %1046 = vmatprep.subr.bf16.mxu0 0
        %1047 = vmatpush2.bf16.msra.mxu0 0
        %1048 = vmatprep.subr.bf16.mxu0 0
        %1049 = vmatpush2.bf16.msra.mxu0 0
        %1050 = vmatprep.subr.bf16.mxu0 0
        %1051 = vmatpush2.bf16.msra.mxu0 0
        %1052 = vmatprep.subr.bf16.mxu0 0
        %1053 = vmatpush2.bf16.msra.mxu0 0
        %1054 = vmatprep.subr.bf16.mxu0 0
        %1055 = vmatpush2.bf16.msra.mxu0 0
        %1056 = vmatprep.subr.bf16.mxu0 0
        %1057 = vmatpush2.bf16.msra.mxu0 0
        %1058 = vmatprep.mubr.bf16.mxu0 0
        %1059 = vmatmul.mubr.bf16.gmra.mxu0 %v1021
        %v1060 = vpop.f32.mrf.mxu0
        %v1061 = vadd.f32 0.0, %v1060
        %v1062 = vpop.f32.mrf.mxu0
        %v1063 = vpop.f32.mrf.mxu0
        %v1064 = vpop.f32.mrf.mxu0
        %1065 = vdwg.mxu0
        // While loop
        $region85: #{tpu_custom_call.1} parent=63 // loop_pre_header
          _
        $region86: #{tpu_custom_call.1} parent=63 // loop_header
          %s1067 = sphi 0, %s1069
          %p1068 = scmp.ge.s32.totalorder %s1067, %s33
          %v1072 = vphi %v835, %v1281
          %v1073 = vphi %v838, %v1282
          %v1074 = vphi %v841, %v1283
          %v1075 = vphi %v844, %v1284
          %v1076 = vphi %v859, %v1325
          %v1077 = vphi %v862, %v1326
          %v1078 = vphi %v865, %v1327
          %v1079 = vphi %v868, %v1328
          %v1080 = vphi %v917, %v1521
          %v1081 = vphi %v965, %v1522
          %v1082 = vphi %v1013, %v1523
          %v1083 = vphi %v1061, %v1524
        $region87: #{tpu_custom_call.1} parent=63 // loop_header_branch
          %1071 = sbr.rel (%p1068) target = $region91
        $region88: #{tpu_custom_call.1} parent=63 // loop_body
          %s1084 = smul.u32 %s1067, 4
          %s1085 = smul.addr %s1084, 4
          %s1086 = scalar_lea.vmem [#allocation2], %s1085
          %v1087 = vld [vmem:[%s1086] sm:$0xf]
          %v1088 = vld [vmem:[%s1086 + $0x4] sm:$0xf]
          %v1089 = vld [vmem:[%s1086 + $0x8] sm:$0xf]
          %v1090 = vld [vmem:[%s1086 + $0xc] sm:$0xf]
          %s1091 = smul.addr %s1084, 4
          %s1092 = scalar_lea.vmem [#allocation3], %s1091
          %v1093 = vld [vmem:[%s1092] sm:$0xf]
          %v1094 = vld [vmem:[%s1092 + $0x4] sm:$0xf]
          %v1095 = vld [vmem:[%s1092 + $0x8] sm:$0xf]
          %v1096 = vld [vmem:[%s1092 + $0xc] sm:$0xf]
          %v1098 = vsel %vm636, %v1087, 0
          %1100 = vmatprep.subr.bf16.mxu0 0
          %1101 = vmatpush1.bf16.xpose.msra.mxu0 0
          %1102 = vmatprep.subr.bf16.mxu0 0
          %1103 = vmatpush1.bf16.xpose.msra.mxu0 0
          %1104 = vmatprep.subr.bf16.mxu0 0
          %1105 = vmatpush1.bf16.xpose.msra.mxu0 0
          %1106 = vmatprep.subr.bf16.mxu0 0
          %1107 = vmatpush1.bf16.xpose.msra.mxu0 0
          %1108 = vmatprep.subr.bf16.mxu0 0
          %1109 = vmatpush1.bf16.xpose.msra.mxu0 0
          %1110 = vmatprep.subr.bf16.mxu0 0
          %1111 = vmatpush1.bf16.xpose.msra.mxu0 0
          %1112 = vmatprep.subr.bf16.mxu0 0
          %1113 = vmatpush1.bf16.xpose.msra.mxu0 0
          %1114 = vmatprep.subr.bf16.mxu0 0
          %1115 = vmatpush1.bf16.xpose.msra.mxu0 %v1098
          %1116 = vmatprep.subr.bf16.mxu0 0
          %1117 = vmatpush2.bf16.xpose.msra.mxu0 0
          %1118 = vmatprep.subr.bf16.mxu0 0
          %1119 = vmatpush2.bf16.xpose.msra.mxu0 0
          %1120 = vmatprep.subr.bf16.mxu0 0
          %1121 = vmatpush2.bf16.xpose.msra.mxu0 0
          %1122 = vmatprep.subr.bf16.mxu0 0
          %1123 = vmatpush2.bf16.xpose.msra.mxu0 0
          %1124 = vmatprep.subr.bf16.mxu0 0
          %1125 = vmatpush2.bf16.xpose.msra.mxu0 0
          %1126 = vmatprep.subr.bf16.mxu0 0
          %1127 = vmatpush2.bf16.xpose.msra.mxu0 0
          %1128 = vmatprep.subr.bf16.mxu0 0
          %1129 = vmatpush2.bf16.xpose.msra.mxu0 0
          %1130 = vmatprep.subr.bf16.mxu0 0
          %1131 = vmatpush2.bf16.xpose.msra.mxu0 0
          %1132 = vmatprep.mubr.bf16.mxu0 0
          %1133 = vmatmul.mubr.bf16.gmra.mxu0 %v638
          %v1134 = vpop.f32.mrf.mxu0
          %v1135 = vadd.f32 0.0, %v1134
          %v1136 = vpop.f32.mrf.mxu0
          %v1137 = vpop.f32.mrf.mxu0
          %v1138 = vpop.f32.mrf.mxu0
          %1139 = vdwg.mxu0
          %v1141 = vsel %vm636, %v1088, 0
          %1143 = vmatprep.subr.bf16.mxu0 0
          %1144 = vmatpush1.bf16.xpose.msra.mxu0 0
          %1145 = vmatprep.subr.bf16.mxu0 0
          %1146 = vmatpush1.bf16.xpose.msra.mxu0 0
          %1147 = vmatprep.subr.bf16.mxu0 0
          %1148 = vmatpush1.bf16.xpose.msra.mxu0 0
          %1149 = vmatprep.subr.bf16.mxu0 0
          %1150 = vmatpush1.bf16.xpose.msra.mxu0 0
          %1151 = vmatprep.subr.bf16.mxu0 0
          %1152 = vmatpush1.bf16.xpose.msra.mxu0 0
          %1153 = vmatprep.subr.bf16.mxu0 0
          %1154 = vmatpush1.bf16.xpose.msra.mxu0 0
          %1155 = vmatprep.subr.bf16.mxu0 0
          %1156 = vmatpush1.bf16.xpose.msra.mxu0 0
          %1157 = vmatprep.subr.bf16.mxu0 0
          %1158 = vmatpush1.bf16.xpose.msra.mxu0 %v1141
          %1159 = vmatprep.subr.bf16.mxu0 0
          %1160 = vmatpush2.bf16.xpose.msra.mxu0 0
          %1161 = vmatprep.subr.bf16.mxu0 0
          %1162 = vmatpush2.bf16.xpose.msra.mxu0 0
          %1163 = vmatprep.subr.bf16.mxu0 0
          %1164 = vmatpush2.bf16.xpose.msra.mxu0 0
          %1165 = vmatprep.subr.bf16.mxu0 0
          %1166 = vmatpush2.bf16.xpose.msra.mxu0 0
          %1167 = vmatprep.subr.bf16.mxu0 0
          %1168 = vmatpush2.bf16.xpose.msra.mxu0 0
          %1169 = vmatprep.subr.bf16.mxu0 0
          %1170 = vmatpush2.bf16.xpose.msra.mxu0 0
          %1171 = vmatprep.subr.bf16.mxu0 0
          %1172 = vmatpush2.bf16.xpose.msra.mxu0 0
          %1173 = vmatprep.subr.bf16.mxu0 0
          %1174 = vmatpush2.bf16.xpose.msra.mxu0 0
          %1175 = vmatprep.mubr.bf16.mxu0 0
          %1176 = vmatmul.mubr.bf16.gmra.mxu0 %v686
          %v1177 = vpop.f32.mrf.mxu0
          %v1178 = vadd.f32 0.0, %v1177
          %v1179 = vpop.f32.mrf.mxu0
          %v1180 = vpop.f32.mrf.mxu0
          %v1181 = vpop.f32.mrf.mxu0
          %1182 = vdwg.mxu0
          %v1184 = vsel %vm636, %v1089, 0
          %1186 = vmatprep.subr.bf16.mxu0 0
          %1187 = vmatpush1.bf16.xpose.msra.mxu0 0
          %1188 = vmatprep.subr.bf16.mxu0 0
          %1189 = vmatpush1.bf16.xpose.msra.mxu0 0
          %1190 = vmatprep.subr.bf16.mxu0 0
          %1191 = vmatpush1.bf16.xpose.msra.mxu0 0
          %1192 = vmatprep.subr.bf16.mxu0 0
          %1193 = vmatpush1.bf16.xpose.msra.mxu0 0
          %1194 = vmatprep.subr.bf16.mxu0 0
          %1195 = vmatpush1.bf16.xpose.msra.mxu0 0
          %1196 = vmatprep.subr.bf16.mxu0 0
          %1197 = vmatpush1.bf16.xpose.msra.mxu0 0
          %1198 = vmatprep.subr.bf16.mxu0 0
          %1199 = vmatpush1.bf16.xpose.msra.mxu0 0
          %1200 = vmatprep.subr.bf16.mxu0 0
          %1201 = vmatpush1.bf16.xpose.msra.mxu0 %v1184
          %1202 = vmatprep.subr.bf16.mxu0 0
          %1203 = vmatpush2.bf16.xpose.msra.mxu0 0
          %1204 = vmatprep.subr.bf16.mxu0 0
          %1205 = vmatpush2.bf16.xpose.msra.mxu0 0
          %1206 = vmatprep.subr.bf16.mxu0 0
          %1207 = vmatpush2.bf16.xpose.msra.mxu0 0
          %1208 = vmatprep.subr.bf16.mxu0 0
          %1209 = vmatpush2.bf16.xpose.msra.mxu0 0
          %1210 = vmatprep.subr.bf16.mxu0 0
          %1211 = vmatpush2.bf16.xpose.msra.mxu0 0
          %1212 = vmatprep.subr.bf16.mxu0 0
          %1213 = vmatpush2.bf16.xpose.msra.mxu0 0
          %1214 = vmatprep.subr.bf16.mxu0 0
          %1215 = vmatpush2.bf16.xpose.msra.mxu0 0
          %1216 = vmatprep.subr.bf16.mxu0 0
          %1217 = vmatpush2.bf16.xpose.msra.mxu0 0
          %1218 = vmatprep.mubr.bf16.mxu0 0
          %1219 = vmatmul.mubr.bf16.gmra.mxu0 %v734
          %v1220 = vpop.f32.mrf.mxu0
          %v1221 = vadd.f32 0.0, %v1220
          %v1222 = vpop.f32.mrf.mxu0
          %v1223 = vpop.f32.mrf.mxu0
          %v1224 = vpop.f32.mrf.mxu0
          %1225 = vdwg.mxu0
          %v1227 = vsel %vm636, %v1090, 0
          %1229 = vmatprep.subr.bf16.mxu0 0
          %1230 = vmatpush1.bf16.xpose.msra.mxu0 0
          %1231 = vmatprep.subr.bf16.mxu0 0
          %1232 = vmatpush1.bf16.xpose.msra.mxu0 0
          %1233 = vmatprep.subr.bf16.mxu0 0
          %1234 = vmatpush1.bf16.xpose.msra.mxu0 0
          %1235 = vmatprep.subr.bf16.mxu0 0
          %1236 = vmatpush1.bf16.xpose.msra.mxu0 0
          %1237 = vmatprep.subr.bf16.mxu0 0
          %1238 = vmatpush1.bf16.xpose.msra.mxu0 0
          %1239 = vmatprep.subr.bf16.mxu0 0
          %1240 = vmatpush1.bf16.xpose.msra.mxu0 0
          %1241 = vmatprep.subr.bf16.mxu0 0
          %1242 = vmatpush1.bf16.xpose.msra.mxu0 0
          %1243 = vmatprep.subr.bf16.mxu0 0
          %1244 = vmatpush1.bf16.xpose.msra.mxu0 %v1227
          %1245 = vmatprep.subr.bf16.mxu0 0
          %1246 = vmatpush2.bf16.xpose.msra.mxu0 0
          %1247 = vmatprep.subr.bf16.mxu0 0
          %1248 = vmatpush2.bf16.xpose.msra.mxu0 0
          %1249 = vmatprep.subr.bf16.mxu0 0
          %1250 = vmatpush2.bf16.xpose.msra.mxu0 0
          %1251 = vmatprep.subr.bf16.mxu0 0
          %1252 = vmatpush2.bf16.xpose.msra.mxu0 0
          %1253 = vmatprep.subr.bf16.mxu0 0
          %1254 = vmatpush2.bf16.xpose.msra.mxu0 0
          %1255 = vmatprep.subr.bf16.mxu0 0
          %1256 = vmatpush2.bf16.xpose.msra.mxu0 0
          %1257 = vmatprep.subr.bf16.mxu0 0
          %1258 = vmatpush2.bf16.xpose.msra.mxu0 0
          %1259 = vmatprep.subr.bf16.mxu0 0
          %1260 = vmatpush2.bf16.xpose.msra.mxu0 0
          %1261 = vmatprep.mubr.bf16.mxu0 0
          %1262 = vmatmul.mubr.bf16.gmra.mxu0 %v782
          %v1263 = vpop.f32.mrf.mxu0
          %v1264 = vadd.f32 0.0, %v1263
          %v1265 = vpop.f32.mrf.mxu0
          %v1266 = vpop.f32.mrf.mxu0
          %v1267 = vpop.f32.mrf.mxu0
          %1268 = vdwg.mxu0
          %v1269 = vsel %vm636, %v1135, -inf
          %1270 = vmax.xlane.f32.xlu0 %v1269
          %v1271 = vpop.xlane.xlu0 %1270
          %v1272 = vsel %vm636, %v1178, -inf
          %1273 = vmax.xlane.f32.xlu0 %v1272
          %v1274 = vpop.xlane.xlu0 %1273
          %v1275 = vsel %vm636, %v1221, -inf
          %1276 = vmax.xlane.f32.xlu0 %v1275
          %v1277 = vpop.xlane.xlu0 %1276
          %v1278 = vsel %vm636, %v1264, -inf
          %1279 = vmax.xlane.f32.xlu0 %v1278
          %v1280 = vpop.xlane.xlu0 %1279
          %v1281 = vmax.f32 %v1072, %v1271
          %v1282 = vmax.f32 %v1073, %v1274
          %v1283 = vmax.f32 %v1074, %v1277
          %v1284 = vmax.f32 %v1075, %v1280
          %v1285 = vsub.f32 %v1072, %v1281
          %v1286 = vsub.f32 %v1073, %v1282
          %v1287 = vsub.f32 %v1074, %v1283
          %v1288 = vsub.f32 %v1075, %v1284
          %v1289 = vmul.f32 %v1285, 1.442695
          %v1290 = vpow.pop %v1289
          %v1291 = vmul.f32 %v1286, 1.442695
          %v1292 = vpow.pop %v1291
          %v1293 = vmul.f32 %v1287, 1.442695
          %v1294 = vpow.pop %v1293
          %v1295 = vmul.f32 %v1288, 1.442695
          %v1296 = vpow.pop %v1295
          %v1297 = vsub.f32 %v1135, %v1281
          %v1298 = vsub.f32 %v1178, %v1282
          %v1299 = vsub.f32 %v1221, %v1283
          %v1300 = vsub.f32 %v1264, %v1284
          %v1301 = vmul.f32 %v1297, 1.442695
          %v1302 = vpow.pop %v1301
          %v1303 = vmul.f32 %v1298, 1.442695
          %v1304 = vpow.pop %v1303
          %v1305 = vmul.f32 %v1299, 1.442695
          %v1306 = vpow.pop %v1305
          %v1307 = vmul.f32 %v1300, 1.442695
          %v1308 = vpow.pop %v1307
          %v1309 = vmul.f32 %v1290, %v1076
          %v1310 = vmul.f32 %v1292, %v1077
          %v1311 = vmul.f32 %v1294, %v1078
          %v1312 = vmul.f32 %v1296, %v1079
          %v1313 = vsel %vm636, %v1302, 0.0
          %1314 = vadd.xlane.f32.xlu0 %v1313
          %v1315 = vpop.xlane.xlu0 %1314
          %v1316 = vsel %vm636, %v1304, 0.0
          %1317 = vadd.xlane.f32.xlu0 %v1316
          %v1318 = vpop.xlane.xlu0 %1317
          %v1319 = vsel %vm636, %v1306, 0.0
          %1320 = vadd.xlane.f32.xlu0 %v1319
          %v1321 = vpop.xlane.xlu0 %1320
          %v1322 = vsel %vm636, %v1308, 0.0
          %1323 = vadd.xlane.f32.xlu0 %v1322
          %v1324 = vpop.xlane.xlu0 %1323
          %v1325 = vadd.f32 %v1309, %v1315
          %v1326 = vadd.f32 %v1310, %v1318
          %v1327 = vadd.f32 %v1311, %v1321
          %v1328 = vadd.f32 %v1312, %v1324
          %v1329 = vmul.f32 %v1290, %v1080
          %v1330 = vmul.f32 %v1292, %v1081
          %v1331 = vmul.f32 %v1294, %v1082
          %v1332 = vmul.f32 %v1296, %v1083
          %v1333 = vpack.c.bf16 %v1302, %v1302
          %v1334 = vpack.c.bf16 %v1304, %v1304
          %v1335 = vpack.c.bf16 %v1306, %v1306
          %v1336 = vpack.c.bf16 %v1308, %v1308
          %v1338 = vsel %vm636, %v1333, 0
          %v1341 = vsel %vm878, %v1093, 0
          %1343 = vmatprep.subr.bf16.mxu0 0
          %1344 = vmatpush1.bf16.msra.mxu0 0
          %1345 = vmatprep.subr.bf16.mxu0 0
          %1346 = vmatpush1.bf16.msra.mxu0 0
          %1347 = vmatprep.subr.bf16.mxu0 0
          %1348 = vmatpush1.bf16.msra.mxu0 0
          %1349 = vmatprep.subr.bf16.mxu0 0
          %1350 = vmatpush1.bf16.msra.mxu0 0
          %1351 = vmatprep.subr.bf16.mxu0 0
          %1352 = vmatpush1.bf16.msra.mxu0 0
          %1353 = vmatprep.subr.bf16.mxu0 0
          %1354 = vmatpush1.bf16.msra.mxu0 0
          %1355 = vmatprep.subr.bf16.mxu0 0
          %1356 = vmatpush1.bf16.msra.mxu0 0
          %1357 = vmatprep.subr.bf16.mxu0 0
          %1358 = vmatpush1.bf16.msra.mxu0 %v1341
          %1359 = vmatprep.subr.bf16.mxu0 0
          %1360 = vmatpush2.bf16.msra.mxu0 0
          %1361 = vmatprep.subr.bf16.mxu0 0
          %1362 = vmatpush2.bf16.msra.mxu0 0
          %1363 = vmatprep.subr.bf16.mxu0 0
          %1364 = vmatpush2.bf16.msra.mxu0 0
          %1365 = vmatprep.subr.bf16.mxu0 0
          %1366 = vmatpush2.bf16.msra.mxu0 0
          %1367 = vmatprep.subr.bf16.mxu0 0
          %1368 = vmatpush2.bf16.msra.mxu0 0
          %1369 = vmatprep.subr.bf16.mxu0 0
          %1370 = vmatpush2.bf16.msra.mxu0 0
          %1371 = vmatprep.subr.bf16.mxu0 0
          %1372 = vmatpush2.bf16.msra.mxu0 0
          %1373 = vmatprep.subr.bf16.mxu0 0
          %1374 = vmatpush2.bf16.msra.mxu0 0
          %1375 = vmatprep.mubr.bf16.mxu0 0
          %1376 = vmatmul.mubr.bf16.gmra.mxu0 %v1338
          %v1377 = vpop.f32.mrf.mxu0
          %v1378 = vadd.f32 0.0, %v1377
          %v1379 = vpop.f32.mrf.mxu0
          %v1380 = vpop.f32.mrf.mxu0
          %v1381 = vpop.f32.mrf.mxu0
          %1382 = vdwg.mxu0
          %v1384 = vsel %vm636, %v1334, 0
          %v1387 = vsel %vm878, %v1094, 0
          %1389 = vmatprep.subr.bf16.mxu0 0
          %1390 = vmatpush1.bf16.msra.mxu0 0
          %1391 = vmatprep.subr.bf16.mxu0 0
          %1392 = vmatpush1.bf16.msra.mxu0 0
          %1393 = vmatprep.subr.bf16.mxu0 0
          %1394 = vmatpush1.bf16.msra.mxu0 0
          %1395 = vmatprep.subr.bf16.mxu0 0
          %1396 = vmatpush1.bf16.msra.mxu0 0
          %1397 = vmatprep.subr.bf16.mxu0 0
          %1398 = vmatpush1.bf16.msra.mxu0 0
          %1399 = vmatprep.subr.bf16.mxu0 0
          %1400 = vmatpush1.bf16.msra.mxu0 0
          %1401 = vmatprep.subr.bf16.mxu0 0
          %1402 = vmatpush1.bf16.msra.mxu0 0
          %1403 = vmatprep.subr.bf16.mxu0 0
          %1404 = vmatpush1.bf16.msra.mxu0 %v1387
          %1405 = vmatprep.subr.bf16.mxu0 0
          %1406 = vmatpush2.bf16.msra.mxu0 0
          %1407 = vmatprep.subr.bf16.mxu0 0
          %1408 = vmatpush2.bf16.msra.mxu0 0
          %1409 = vmatprep.subr.bf16.mxu0 0
          %1410 = vmatpush2.bf16.msra.mxu0 0
          %1411 = vmatprep.subr.bf16.mxu0 0
          %1412 = vmatpush2.bf16.msra.mxu0 0
          %1413 = vmatprep.subr.bf16.mxu0 0
          %1414 = vmatpush2.bf16.msra.mxu0 0
          %1415 = vmatprep.subr.bf16.mxu0 0
          %1416 = vmatpush2.bf16.msra.mxu0 0
          %1417 = vmatprep.subr.bf16.mxu0 0
          %1418 = vmatpush2.bf16.msra.mxu0 0
          %1419 = vmatprep.subr.bf16.mxu0 0
          %1420 = vmatpush2.bf16.msra.mxu0 0
          %1421 = vmatprep.mubr.bf16.mxu0 0
          %1422 = vmatmul.mubr.bf16.gmra.mxu0 %v1384
          %v1423 = vpop.f32.mrf.mxu0
          %v1424 = vadd.f32 0.0, %v1423
          %v1425 = vpop.f32.mrf.mxu0
          %v1426 = vpop.f32.mrf.mxu0
          %v1427 = vpop.f32.mrf.mxu0
          %1428 = vdwg.mxu0
          %v1430 = vsel %vm636, %v1335, 0
          %v1433 = vsel %vm878, %v1095, 0
          %1435 = vmatprep.subr.bf16.mxu0 0
          %1436 = vmatpush1.bf16.msra.mxu0 0
          %1437 = vmatprep.subr.bf16.mxu0 0
          %1438 = vmatpush1.bf16.msra.mxu0 0
          %1439 = vmatprep.subr.bf16.mxu0 0
          %1440 = vmatpush1.bf16.msra.mxu0 0
          %1441 = vmatprep.subr.bf16.mxu0 0
          %1442 = vmatpush1.bf16.msra.mxu0 0
          %1443 = vmatprep.subr.bf16.mxu0 0
          %1444 = vmatpush1.bf16.msra.mxu0 0
          %1445 = vmatprep.subr.bf16.mxu0 0
          %1446 = vmatpush1.bf16.msra.mxu0 0
          %1447 = vmatprep.subr.bf16.mxu0 0
          %1448 = vmatpush1.bf16.msra.mxu0 0
          %1449 = vmatprep.subr.bf16.mxu0 0
          %1450 = vmatpush1.bf16.msra.mxu0 %v1433
          %1451 = vmatprep.subr.bf16.mxu0 0
          %1452 = vmatpush2.bf16.msra.mxu0 0
          %1453 = vmatprep.subr.bf16.mxu0 0
          %1454 = vmatpush2.bf16.msra.mxu0 0
          %1455 = vmatprep.subr.bf16.mxu0 0
          %1456 = vmatpush2.bf16.msra.mxu0 0
          %1457 = vmatprep.subr.bf16.mxu0 0
          %1458 = vmatpush2.bf16.msra.mxu0 0
          %1459 = vmatprep.subr.bf16.mxu0 0
          %1460 = vmatpush2.bf16.msra.mxu0 0
          %1461 = vmatprep.subr.bf16.mxu0 0
          %1462 = vmatpush2.bf16.msra.mxu0 0
          %1463 = vmatprep.subr.bf16.mxu0 0
          %1464 = vmatpush2.bf16.msra.mxu0 0
          %1465 = vmatprep.subr.bf16.mxu0 0
          %1466 = vmatpush2.bf16.msra.mxu0 0
          %1467 = vmatprep.mubr.bf16.mxu0 0
          %1468 = vmatmul.mubr.bf16.gmra.mxu0 %v1430
          %v1469 = vpop.f32.mrf.mxu0
          %v1470 = vadd.f32 0.0, %v1469
          %v1471 = vpop.f32.mrf.mxu0
          %v1472 = vpop.f32.mrf.mxu0
          %v1473 = vpop.f32.mrf.mxu0
          %1474 = vdwg.mxu0
          %v1476 = vsel %vm636, %v1336, 0
          %v1479 = vsel %vm878, %v1096, 0
          %1481 = vmatprep.subr.bf16.mxu0 0
          %1482 = vmatpush1.bf16.msra.mxu0 0
          %1483 = vmatprep.subr.bf16.mxu0 0
          %1484 = vmatpush1.bf16.msra.mxu0 0
          %1485 = vmatprep.subr.bf16.mxu0 0
          %1486 = vmatpush1.bf16.msra.mxu0 0
          %1487 = vmatprep.subr.bf16.mxu0 0
          %1488 = vmatpush1.bf16.msra.mxu0 0
          %1489 = vmatprep.subr.bf16.mxu0 0
          %1490 = vmatpush1.bf16.msra.mxu0 0
          %1491 = vmatprep.subr.bf16.mxu0 0
          %1492 = vmatpush1.bf16.msra.mxu0 0
          %1493 = vmatprep.subr.bf16.mxu0 0
          %1494 = vmatpush1.bf16.msra.mxu0 0
          %1495 = vmatprep.subr.bf16.mxu0 0
          %1496 = vmatpush1.bf16.msra.mxu0 %v1479
          %1497 = vmatprep.subr.bf16.mxu0 0
          %1498 = vmatpush2.bf16.msra.mxu0 0
          %1499 = vmatprep.subr.bf16.mxu0 0
          %1500 = vmatpush2.bf16.msra.mxu0 0
          %1501 = vmatprep.subr.bf16.mxu0 0
          %1502 = vmatpush2.bf16.msra.mxu0 0
          %1503 = vmatprep.subr.bf16.mxu0 0
          %1504 = vmatpush2.bf16.msra.mxu0 0
          %1505 = vmatprep.subr.bf16.mxu0 0
          %1506 = vmatpush2.bf16.msra.mxu0 0
          %1507 = vmatprep.subr.bf16.mxu0 0
          %1508 = vmatpush2.bf16.msra.mxu0 0
          %1509 = vmatprep.subr.bf16.mxu0 0
          %1510 = vmatpush2.bf16.msra.mxu0 0
          %1511 = vmatprep.subr.bf16.mxu0 0
          %1512 = vmatpush2.bf16.msra.mxu0 0
          %1513 = vmatprep.mubr.bf16.mxu0 0
          %1514 = vmatmul.mubr.bf16.gmra.mxu0 %v1476
          %v1515 = vpop.f32.mrf.mxu0
          %v1516 = vadd.f32 0.0, %v1515
          %v1517 = vpop.f32.mrf.mxu0
          %v1518 = vpop.f32.mrf.mxu0
          %v1519 = vpop.f32.mrf.mxu0
          %1520 = vdwg.mxu0
          %v1521 = vadd.f32 %v1329, %v1378
          %v1522 = vadd.f32 %v1330, %v1424
          %v1523 = vadd.f32 %v1331, %v1470
          %v1524 = vadd.f32 %v1332, %v1516
        $region89: #{tpu_custom_call.1} parent=63 // loop_footer
          %s1069 = sadd.s32 %s1067, 1
        $region90: #{tpu_custom_call.1} parent=63 // loop_footer_branch
          %1066 = sbr.rel target = $region86
        $region91: #{tpu_custom_call.1} parent=63 // loop_exit
          _
        %v1525 = vrcp.pop %v1076
        %v1526 = vrcp.pop %v1077
        %v1527 = vrcp.pop %v1078
        %v1528 = vrcp.pop %v1079
        %v1529 = vmul.f32 %v1080, %v1525
        %v1530 = vmul.f32 %v1081, %v1526
        %v1531 = vmul.f32 %v1082, %v1527
        %v1532 = vmul.f32 %v1083, %v1528
        %1534 = vrot.lane.b32.xlu0 %v1530, 8
        %v1535 = vpop.permute.xlu0 %1534
        %1538 = vrot.lane.b32.xlu0 %v1531, 16
        %v1539 = vpop.permute.xlu0 %1538
        %1542 = vrot.lane.b32.xlu0 %v1532, 24
        %v1543 = vpop.permute.xlu0 %1542
        %v1545 = vsel %vm636, %v1529, %v1535
        %vm1546 = vcmask 130048
        %v1547 = vsel %vm1546, %v1545, %v1539
        %vm1548 = vcmask 195584
        %v1549 = vsel %vm1548, %v1547, %v1543
        %v1550 = vpack.c.bf16 %v1549, %v1549
        %v1551 = vld [vmem:[#allocation7] sm:$0xf]
        %v1552 = vld [vmem:[#allocation7 + $0x4] sm:$0xf]
        %v1553 = vld [vmem:[#allocation7 + $0x8] sm:$0xf]
        %v1554 = vld [vmem:[#allocation7 + $0xc] sm:$0xf]
        %v1555 = vld [vmem:[#allocation9] sm:$0x1]
        %v1557 = vlaneseq
        %v1558 = vshrl.u32 %v1557, 7
        %v1559 = vsub.s32 0, %v1558
        %v1560 = vrot.slane %v1555, %v1559
        %v1566 = vunpack.c.l.b16 %v1551
        %v1567 = vunpack.c.l.b16 %v1552
        %v1568 = vunpack.c.l.b16 %v1553
        %v1569 = vunpack.c.l.b16 %v1554
        %v1570 = vpack.c.b16 %v1567, %v1566
        %v1571 = vpack.c.b16 %v1569, %v1568
        %v1575 = vsel %vm479, %v1550, 0
        %1577 = vmatprep.subr.bf16.mxu0 0
        %1578 = vmatpush1.bf16.msra.mxu0 0
        %1579 = vmatprep.subr.bf16.mxu0 0
        %1580 = vmatpush1.bf16.msra.mxu0 0
        %1581 = vmatprep.subr.bf16.mxu0 0
        %1582 = vmatpush1.bf16.msra.mxu0 0
        %1583 = vmatprep.subr.bf16.mxu0 0
        %1584 = vmatpush1.bf16.msra.mxu0 0
        %1585 = vmatprep.subr.bf16.mxu0 0
        %1586 = vmatpush1.bf16.msra.mxu0 0
        %1587 = vmatprep.subr.bf16.mxu0 0
        %1588 = vmatpush1.bf16.msra.mxu0 0
        %1589 = vmatprep.subr.bf16.mxu0 0
        %1590 = vmatpush1.bf16.msra.mxu0 %v1571
        %1591 = vmatprep.subr.bf16.mxu0 0
        %1592 = vmatpush1.bf16.msra.mxu0 %v1570
        %1593 = vmatprep.subr.bf16.mxu0 0
        %1594 = vmatpush2.bf16.msra.mxu0 0
        %1595 = vmatprep.subr.bf16.mxu0 0
        %1596 = vmatpush2.bf16.msra.mxu0 0
        %1597 = vmatprep.subr.bf16.mxu0 0
        %1598 = vmatpush2.bf16.msra.mxu0 0
        %1599 = vmatprep.subr.bf16.mxu0 0
        %1600 = vmatpush2.bf16.msra.mxu0 0
        %1601 = vmatprep.subr.bf16.mxu0 0
        %1602 = vmatpush2.bf16.msra.mxu0 0
        %1603 = vmatprep.subr.bf16.mxu0 0
        %1604 = vmatpush2.bf16.msra.mxu0 0
        %1605 = vmatprep.subr.bf16.mxu0 0
        %1606 = vmatpush2.bf16.msra.mxu0 0
        %1607 = vmatprep.subr.bf16.mxu0 0
        %1608 = vmatpush2.bf16.msra.mxu0 0
        %1609 = vmatprep.mubr.bf16.mxu0 0
        %1610 = vmatmul.mubr.bf16.gmra.mxu0 %v1575
        %v1611 = vpop.f32.mrf.mxu0
        %v1612 = vadd.f32 %v1560, %v1611
        %v1613 = vpop.f32.mrf.mxu0
        %v1614 = vpop.f32.mrf.mxu0
        %v1615 = vpop.f32.mrf.mxu0
        %1616 = vdwg.mxu0
        %v1617 = vadd.f32 %v476, %v1612
        %v1618 = vld [vmem:[#allocation10] sm:$0x1]
        %v1619 = vld [vmem:[#allocation12] sm:$0x1]
        %v1620 = vsel %vm479, %v1617, 0.0
        %1621 = vadd.xlane.f32.xlu0 %v1620
        %v1622 = vpop.xlane.xlu0 %1621
        %v1623 = vmul.f32 %v1622, %v483
        %v1624 = vsub.f32 %v1617, %v1623
        %v1625 = vmul.f32 %v1624, %v1624
        %v1626 = vsel %vm479, %v1625, 0.0
        %1627 = vadd.xlane.f32.xlu0 %v1626
        %v1628 = vpop.xlane.xlu0 %1627
        %v1629 = vmul.f32 %v1628, %v483
        %v1630 = vadd.f32 %v1629, 1e-05
        %v1631 = vrsqrt.pop %v1630
        %v1632 = vmul.f32 %v1624, %v1631
        %v1634 = vlaneseq
        %v1635 = vshrl.u32 %v1634, 7
        %v1636 = vsub.s32 0, %v1635
        %v1637 = vrot.slane %v1618, %v1636
        %v1639 = vmul.f32 %v1632, %v1637
        %v1641 = vlaneseq
        %v1642 = vshrl.u32 %v1641, 7
        %v1643 = vsub.s32 0, %v1642
        %v1644 = vrot.slane %v1619, %v1643
        %v1646 = vadd.f32 %v1639, %v1644
        %v1647 = vpack.c.bf16 %v1646, %v1646
        %v1648 = vld [vmem:[%s9] sm:$0xff]
        %v1649 = vld [vmem:[%s9 + $0x8] sm:$0xff]
        %v1650 = vld [vmem:[%s9 + $0x10] sm:$0xff]
        %v1651 = vld [vmem:[%s9 + $0x18] sm:$0xff]
        %v1656 = vunpack.c.l.b16 %v1648
        %v1657 = vunpack.c.h.b16 %v1648
        %v1658 = vunpack.c.l.b16 %v1649
        %v1659 = vunpack.c.h.b16 %v1649
        %v1660 = vunpack.c.l.b16 %v1650
        %v1661 = vunpack.c.h.b16 %v1650
        %v1662 = vunpack.c.l.b16 %v1651
        %v1663 = vunpack.c.h.b16 %v1651
        %v1664 = vpack.c.b16 %v1658, %v1656
        %v1665 = vpack.c.b16 %v1659, %v1657
        %v1666 = vpack.c.b16 %v1662, %v1660
        %v1667 = vpack.c.b16 %v1663, %v1661
        %v1673 = vsel %vm479, %v1647, 0
        %1675 = vmatprep.subr.bf16.mxu0 0
        %1676 = vmatpush1.bf16.msra.mxu0 0
        %1677 = vmatprep.subr.bf16.mxu0 0
        %1678 = vmatpush1.bf16.msra.mxu0 0
        %1679 = vmatprep.subr.bf16.mxu0 0
        %1680 = vmatpush1.bf16.msra.mxu0 0
        %1681 = vmatprep.subr.bf16.mxu0 0
        %1682 = vmatpush1.bf16.msra.mxu0 0
        %1683 = vmatprep.subr.bf16.mxu0 0
        %1684 = vmatpush1.bf16.msra.mxu0 0
        %1685 = vmatprep.subr.bf16.mxu0 0
        %1686 = vmatpush1.bf16.msra.mxu0 0
        %1687 = vmatprep.subr.bf16.mxu0 %v1667
        %1688 = vmatpush1.bf16.msra.mxu0 %v1666
        %1689 = vmatprep.subr.bf16.mxu0 %v1665
        %1690 = vmatpush1.bf16.msra.mxu0 %v1664
        %1691 = vmatprep.subr.bf16.mxu0 0
        %1692 = vmatpush2.bf16.msra.mxu0 0
        %1693 = vmatprep.subr.bf16.mxu0 0
        %1694 = vmatpush2.bf16.msra.mxu0 0
        %1695 = vmatprep.subr.bf16.mxu0 0
        %1696 = vmatpush2.bf16.msra.mxu0 0
        %1697 = vmatprep.subr.bf16.mxu0 0
        %1698 = vmatpush2.bf16.msra.mxu0 0
        %1699 = vmatprep.subr.bf16.mxu0 0
        %1700 = vmatpush2.bf16.msra.mxu0 0
        %1701 = vmatprep.subr.bf16.mxu0 0
        %1702 = vmatpush2.bf16.msra.mxu0 0
        %1703 = vmatprep.subr.bf16.mxu0 0
        %1704 = vmatpush2.bf16.msra.mxu0 0
        %1705 = vmatprep.subr.bf16.mxu0 0
        %1706 = vmatpush2.bf16.msra.mxu0 0
        %1707 = vmatprep.mubr.bf16.mxu0 0
        %1708 = vmatmul.mubr.bf16.gmra.mxu0 %v1673
        %v1709 = vpop.f32.mrf.mxu0
        %v1710 = vadd.f32 0.0, %v1709
        %v1711 = vpop.f32.mrf.mxu0
        %v1712 = vadd.f32 0.0, %v1711
        %v1713 = vpop.f32.mrf.mxu0
        %v1714 = vpop.f32.mrf.mxu0
        %1715 = vdwg.mxu0
        %v1716 = vxor.u32 %v1710, 2147483648
        %v1717 = vmul.f32 %v1716, 1.442695
        %v1718 = vpow.pop %v1717
        %v1719 = vadd.f32 %v1718, 1.0
        %v1720 = vrcp.pop %v1719
        %v1721 = vmul.f32 1.0, %v1720
        %v1722 = vmul.f32 %v1710, %v1721
        %v1723 = vmul.f32 %v1722, %v1712
        %v1724 = vpack.c.bf16 %v1723, %v1723
        %v1725 = vld [vmem:[%s10] sm:$0xf]
        %v1726 = vld [vmem:[%s10 + $0x4] sm:$0xf]
        %v1727 = vld [vmem:[%s10 + $0x8] sm:$0xf]
        %v1728 = vld [vmem:[%s10 + $0xc] sm:$0xf]
        %v1729 = vld [vmem:[%s10 + $0x10] sm:$0xf]
        %v1730 = vld [vmem:[%s10 + $0x14] sm:$0xf]
        %v1731 = vld [vmem:[%s10 + $0x18] sm:$0xf]
        %v1732 = vld [vmem:[%s10 + $0x1c] sm:$0xf]
        %v1733 = vld [vmem:[%s10 + $0x20] sm:$0xf]
        %v1734 = vld [vmem:[%s10 + $0x24] sm:$0xf]
        %v1735 = vld [vmem:[%s10 + $0x28] sm:$0xf]
        %v1736 = vld [vmem:[%s10 + $0x2c] sm:$0xf]
        %v1737 = vld [vmem:[%s10 + $0x30] sm:$0xf]
        %v1738 = vld [vmem:[%s10 + $0x34] sm:$0xf]
        %v1739 = vld [vmem:[%s10 + $0x38] sm:$0xf]
        %v1740 = vld [vmem:[%s10 + $0x3c] sm:$0xf]
        %v1757 = vunpack.c.l.b16 %v1725
        %v1758 = vunpack.c.l.b16 %v1726
        %v1759 = vunpack.c.l.b16 %v1727
        %v1760 = vunpack.c.l.b16 %v1728
        %v1761 = vunpack.c.l.b16 %v1729
        %v1762 = vunpack.c.l.b16 %v1730
        %v1763 = vunpack.c.l.b16 %v1731
        %v1764 = vunpack.c.l.b16 %v1732
        %v1765 = vunpack.c.l.b16 %v1733
        %v1766 = vunpack.c.l.b16 %v1734
        %v1767 = vunpack.c.l.b16 %v1735
        %v1768 = vunpack.c.l.b16 %v1736
        %v1769 = vunpack.c.l.b16 %v1737
        %v1770 = vunpack.c.l.b16 %v1738
        %v1771 = vunpack.c.l.b16 %v1739
        %v1772 = vunpack.c.l.b16 %v1740
        %v1773 = vpack.c.b16 %v1758, %v1757
        %v1774 = vpack.c.b16 %v1760, %v1759
        %v1775 = vpack.c.b16 %v1762, %v1761
        %v1776 = vpack.c.b16 %v1764, %v1763
        %v1777 = vpack.c.b16 %v1766, %v1765
        %v1778 = vpack.c.b16 %v1768, %v1767
        %v1779 = vpack.c.b16 %v1770, %v1769
        %v1780 = vpack.c.b16 %v1772, %v1771
        %1789 = vmatprep.subr.bf16.mxu0 0
        %1790 = vmatpush1.bf16.msra.mxu0 %v1780
        %1791 = vmatprep.subr.bf16.mxu0 0
        %1792 = vmatpush1.bf16.msra.mxu0 %v1779
        %1793 = vmatprep.subr.bf16.mxu0 0
        %1794 = vmatpush1.bf16.msra.mxu0 %v1778
        %1795 = vmatprep.subr.bf16.mxu0 0
        %1796 = vmatpush1.bf16.msra.mxu0 %v1777
        %1797 = vmatprep.subr.bf16.mxu0 0
        %1798 = vmatpush1.bf16.msra.mxu0 %v1776
        %1799 = vmatprep.subr.bf16.mxu0 0
        %1800 = vmatpush1.bf16.msra.mxu0 %v1775
        %1801 = vmatprep.subr.bf16.mxu0 0
        %1802 = vmatpush1.bf16.msra.mxu0 %v1774
        %1803 = vmatprep.subr.bf16.mxu0 0
        %1804 = vmatpush1.bf16.msra.mxu0 %v1773
        %1805 = vmatprep.subr.bf16.mxu0 0
        %1806 = vmatpush2.bf16.msra.mxu0 0
        %1807 = vmatprep.subr.bf16.mxu0 0
        %1808 = vmatpush2.bf16.msra.mxu0 0
        %1809 = vmatprep.subr.bf16.mxu0 0
        %1810 = vmatpush2.bf16.msra.mxu0 0
        %1811 = vmatprep.subr.bf16.mxu0 0
        %1812 = vmatpush2.bf16.msra.mxu0 0
        %1813 = vmatprep.subr.bf16.mxu0 0
        %1814 = vmatpush2.bf16.msra.mxu0 0
        %1815 = vmatprep.subr.bf16.mxu0 0
        %1816 = vmatpush2.bf16.msra.mxu0 0
        %1817 = vmatprep.subr.bf16.mxu0 0
        %1818 = vmatpush2.bf16.msra.mxu0 0
        %1819 = vmatprep.subr.bf16.mxu0 0
        %1820 = vmatpush2.bf16.msra.mxu0 0
        %1821 = vmatprep.mubr.bf16.mxu0 0
        %1822 = vmatmul.mubr.bf16.gmra.mxu0 %v1724
        %v1823 = vpop.f32.mrf.mxu0
        %v1824 = vadd.f32 0.0, %v1823
        %v1825 = vpop.f32.mrf.mxu0
        %v1826 = vpop.f32.mrf.mxu0
        %v1827 = vpop.f32.mrf.mxu0
        %1828 = vdwg.mxu0
        %v1829 = vadd.f32 %v1617, %v1824
        %1830 = vst.msk [vmem:[%s466] sm:$0xff] %vm479, %v1829
        %s1831 = sand.u32 %s288, 1
        %s1832 = scalar_lea.sflag [#allocation6], %s1831
        %s1833 = sand.u32 %s288, 1
        %s1834 = smul.addr %s1833, 8
        %s1835 = scalar_lea.vmem [#allocation13], %s1834
        // Predicated region
        $region92: #{tpu_custom_call.1} parent=63 // pred_check
          %p1836 = pneg %p298
        $region93: #{tpu_custom_call.1} parent=63 // pred_check_branch
          %1838 = sbr.rel (%p1836) target = $region95
        $region94: #{tpu_custom_call.1} parent=63 // pred_region
          %s1840 = ssub.s32 128, 128
          %1841 = vsyncadd %s1832, %s1840
          %s1842 = smul.addr %s32, 2
          %s1843 = sadd.s32 %s33, %s1842
          %s1844 = smul.addr %s1843, 128
          %s1845 = scalar_lea.hbm %s11, %s1844
          %s1847 = sshll.u32 %s1835, 4
          %s1848 = int_to_ptr.vmem [resolvable:$true] %s1847
          %1850 = dma.vmem_to_hbm [thread:$0]  %s1848, 128, %s1845, %s1832
        $region95: #{tpu_custom_call.1} parent=63 // pred_fallthru
          _
      $region64: #{tpu_custom_call.1} parent=5 // pred_fallthru
        _
      %p1851 = scmp.le.s32.totalorder 2, %s23
      // Predicated region
      $region96: #{tpu_custom_call.1} parent=5 // pred_check
        %p1852 = pneg %p1851
      $region97: #{tpu_custom_call.1} parent=5 // pred_check_branch
        %1854 = sbr.rel (%p1852) target = $region99
      $region98: #{tpu_custom_call.1} parent=5 // pred_region
        %s1855 = ssub.s32 %s23, 2
        // Predicated region
        $region100: #{tpu_custom_call.1} parent=98 // pred_check
          %p1856 = pneg %p304
        $region101: #{tpu_custom_call.1} parent=98 // pred_check_branch
          %1858 = sbr.rel (%p1856) target = $region103
        $region102: #{tpu_custom_call.1} parent=98 // pred_region
          %s1859 = sand.u32 %s289, 1
          %s1860 = scalar_lea.sflag [#allocation6], %s1859
          %s1861 = sand.u32 %s289, 1
          %s1862 = smul.addr %s1861, 8
          %s1863 = scalar_lea.vmem [#allocation13], %s1862
          %1864 = dma.done %s1860, 128
        $region103: #{tpu_custom_call.1} parent=98 // pred_fallthru
          _
      $region99: #{tpu_custom_call.1} parent=5 // pred_fallthru
        _
    $region6: #{tpu_custom_call.1} parent=1 // loop_footer
      %s27 = sadd.s32 1, %s23
    $region7: #{tpu_custom_call.1} parent=1 // loop_footer_branch
      %22 = sbr.rel target = $region3
    $region8: #{tpu_custom_call.1} parent=1 // loop_exit
      _
    %1865 = vsyncpa [#allocation5], 1
    %s1866 = scalar_lea.sflag [#allocation5], 1
    %1867 = vsyncpa %s1866, 1
    %1868 = vsyncpa [#allocation8], 1
    %1869 = vsyncpa [#allocation11], 1
    %1870 = vsyncpa [#allocation6], 1
    %s1871 = scalar_lea.sflag [#allocation6], 1
    %1872 = vsyncpa %s1871, 1

</llo_original>
